<compile_context>
chip_gen: v6e
topology: v6e:2x2x1
jax: 0.10.0
libtpu: 0.0.40
codegen_flags: <defaults>
</compile_context>

<pallas_src>
import functools
from typing import NamedTuple

import jax
import jax.numpy as jnp
from jax.experimental import pallas as pl
from jax.experimental.pallas import tpu as pltpu

BN_EPS = 1e-5


def _round_up(n, m):
    return ((n + m - 1) // m) * m


# ---------------------------------------------------------------------------
# Kernel: one wide branch matmul + SE gate, lane-dense everywhere.
# ---------------------------------------------------------------------------
def _seres_kernel(x_ref, wcat_ref, bcat_ref, wse1_ref, wse2_ref, o_ref, *, d_out_p):
    w_dtype = wcat_ref.dtype
    # Cast x to the compute dtype inside the kernel (hidden under the MXU).
    x = x_ref[...].astype(w_dtype)                               # (bm, D_in)

    # One MXU pass over the concatenated (BN-folded) branch weights.
    h = jnp.dot(x, wcat_ref[...], preferred_element_type=jnp.float32)
    h = jnp.maximum(h + bcat_ref[...], 0.0)                      # (bm, 2*D_out_p) f32

    h0 = h[:, :d_out_p]                                          # lane-tile aligned split
    h1 = h[:, d_out_p:]

    # SE attention on branch 1 (wse1/wse2 zero-padded -> numerically exact).
    s = jnp.maximum(
        jnp.dot(h1.astype(w_dtype), wse1_ref[...],
                preferred_element_type=jnp.float32), 0.0)
    gate = jax.nn.sigmoid(
        jnp.dot(s.astype(w_dtype), wse2_ref[...],
                preferred_element_type=jnp.float32))

    o_ref[...] = (h0 + gate * h1).astype(o_ref.dtype)            # f32 epilogue, cast on store


# ---------------------------------------------------------------------------
# One-time parameter preparation (fold / pad / concat / cast) — NOT per call.
# ---------------------------------------------------------------------------
class PreparedParams(NamedTuple):
    wcat: jax.Array    # (D_in, 2*D_out_p)   compute dtype (f32 or bf16)
    bcat: jax.Array    # (1, 2*D_out_p)      f32
    wse1: jax.Array    # (D_out_p, d_emb_p)  compute dtype
    wse2: jax.Array    # (d_emb_p, D_out_p)  compute dtype
    d_out: int         # original (unpadded) output width


def _fold_bn(w, b, g, be, m, v):
    """Fold eval-mode BatchNorm + Linear bias into (W', b')."""
    scale = g / jnp.sqrt(v + BN_EPS)             # (1, D_out)
    return w * scale, (b - m) * scale + be       # (D_in, D_out), (1, D_out)


def prepare_params(params, use_bf16=False):
    """Fold BN into weights, pad D_out / d_emb to lane multiples, concat, cast.

    Call once (outside the hot path); feed the result to seres_block().
    """
    w0, b0 = _fold_bn(params["w0"], params["b0"], params["g0"],
                      params["be0"], params["m0"], params["v0"])
    w1, b1 = _fold_bn(params["w1"], params["b1"], params["g1"],
                      params["be1"], params["m1"], params["v1"])
    wse1, wse2 = params["wse1"], params["wse2"]

    d_in, d_out = w0.shape
    d_emb = wse1.shape[1]
    d_out_p = _round_up(d_out, 128)
    d_emb_p = _round_up(d_emb, 128)
    pad_o, pad_e = d_out_p - d_out, d_emb_p - d_emb

    if pad_o:
        # Zero-padded output lanes: h0=0, h1=0 there -> gate*h1 = 0 -> sliced off.
        w0 = jnp.pad(w0, ((0, 0), (0, pad_o)))
        w1 = jnp.pad(w1, ((0, 0), (0, pad_o)))
        b0 = jnp.pad(b0, ((0, 0), (0, pad_o)))
        b1 = jnp.pad(b1, ((0, 0), (0, pad_o)))
        wse1 = jnp.pad(wse1, ((0, pad_o), (0, 0)))
        wse2 = jnp.pad(wse2, ((0, 0), (0, pad_o)))
    if pad_e:
        # Zero-padded SE hidden lanes contribute exactly 0.
        wse1 = jnp.pad(wse1, ((0, 0), (0, pad_e)))
        wse2 = jnp.pad(wse2, ((0, pad_e), (0, 0)))

    cdt = jnp.bfloat16 if use_bf16 else jnp.float32
    wcat = jnp.concatenate([w0, w1], axis=1).astype(cdt)         # (D_in, 2*D_out_p)
    bcat = jnp.concatenate([b0, b1], axis=1).astype(jnp.float32)  # (1, 2*D_out_p)
    return PreparedParams(wcat=wcat, bcat=bcat,
                          wse1=wse1.astype(cdt), wse2=wse2.astype(cdt),
                          d_out=int(d_out))


# ---------------------------------------------------------------------------
# Jitted forward (x + pre-baked weights only).
# ---------------------------------------------------------------------------
@functools.partial(
    jax.jit,
    static_argnames=("d_out", "block_b", "out_dtype", "single_buffer_weights"))
def _seres_forward(x, wcat, bcat, wse1, wse2, *, d_out, block_b, out_dtype,
                   single_buffer_weights):
    B, d_in = x.shape
    two_dout = wcat.shape[1]
    d_out_p = two_dout // 2
    d_emb_p = wse1.shape[1]

    # Batch tile: multiple of 8 sublanes; pad ragged batches up and slice back.
    block_b = _round_up(max(8, min(block_b, _round_up(B, 8))), 8)
    B_p = _round_up(B, block_b)
    if B_p != B:
        x = jnp.pad(x, ((0, B_p - B), (0, 0)))

    w_bytes = jnp.dtype(wcat.dtype).itemsize
    out_bytes = jnp.dtype(out_dtype).itemsize
    weight_bytes = ((d_in * two_dout + 2 * d_out_p * d_emb_p) * w_bytes
                    + two_dout * 4)
    weight_bufs = 1 if single_buffer_weights else 2
    vmem_bytes = (2 * block_b * d_in * 4                 # x double-buffered (f32)
                  + 2 * block_b * d_out_p * out_bytes    # out double-buffered
                  + weight_bufs * weight_bytes           # resident weights
                  + 4 * block_b * two_dout * 4)          # in-kernel f32 intermediates
    vmem_limit = int(min(max(vmem_bytes + (2 << 20), 32 << 20), 64 << 20))

    cost = pl.CostEstimate(
        flops=2 * B_p * d_in * two_dout + 4 * B_p * d_out_p * d_emb_p + 6 * B_p * d_out_p,
        transcendentals=B_p * d_out_p,                   # sigmoid
        bytes_accessed=B_p * d_in * 4 + weight_bytes + B_p * d_out_p * out_bytes)

    if single_buffer_weights:
        # Grid-invariant weights: never re-fetched -> 1 VMEM buffer each.
        wspec = lambda shape: pl.BlockSpec(shape, lambda i: (0, 0),
                                           pipeline_mode=pl.Buffered(1))
    else:
        wspec = lambda shape: pl.BlockSpec(shape, lambda i: (0, 0))

    out = pl.pallas_call(
        functools.partial(_seres_kernel, d_out_p=d_out_p),
        out_shape=jax.ShapeDtypeStruct((B_p, d_out_p), out_dtype),
        grid_spec=pltpu.PrefetchScalarGridSpec(
            num_scalar_prefetch=0,
            grid=(B_p // block_b,),
            in_specs=[
                pl.BlockSpec((block_b, d_in), lambda i: (i, 0)),  # x (tiled over batch)
                wspec((d_in, two_dout)),                          # wcat
                wspec((1, two_dout)),                             # bcat
                wspec((d_out_p, d_emb_p)),                        # wse1 (padded)
                wspec((d_emb_p, d_out_p)),                        # wse2 (padded)
            ],
            out_specs=pl.BlockSpec((block_b, d_out_p), lambda i: (i, 0)),
        ),
        compiler_params=pltpu.CompilerParams(
            dimension_semantics=("parallel",),
            vmem_limit_bytes=vmem_limit),
        cost_estimate=cost,
    )(x, wcat, bcat, wse1, wse2)

    return out[:B, :d_out]


def seres_block(x, prep, *, block_b=256, out_dtype=jnp.float32):
    """SEResBlock forward. x: (B, D_in) f32; prep: PreparedParams."""
    args = (x, prep.wcat, prep.bcat, prep.wse1, prep.wse2)
    kwargs = dict(d_out=prep.d_out, block_b=block_b, out_dtype=out_dtype)
    try:
        return _seres_forward(*args, single_buffer_weights=True, **kwargs)
    except Exception:
        # Fallback for JAX versions without pipeline_mode=pl.Buffered support:
        # default double-buffered weight specs (correct, slightly more VMEM).
        return _seres_forward(*args, single_buffer_weights=False, **kwargs)


# ---------------------------------------------------------------------------
# Plain-JAX reference (un-folded math) + param init
# ---------------------------------------------------------------------------
def _reference(x, p):
    def branch(x, w, b, g, be, m, v):
        z = x @ w + b
        z = (z - m) / jnp.sqrt(v + BN_EPS) * g + be
        return jnp.maximum(z, 0.0)

    h0 = branch(x, p["w0"], p["b0"], p["g0"], p["be0"], p["m0"], p["v0"])
    h1 = branch(x, p["w1"], p["b1"], p["g1"], p["be1"], p["m1"], p["v1"])
    s = jnp.maximum(h1 @ p["wse1"], 0.0)
    gate = jax.nn.sigmoid(s @ p["wse2"])
    return h0 + gate * h1


def init_params(key, d_in, d_out):
    d_emb = d_out // 2
    ks = jax.random.split(key, 10)
    si, so, se = 1.0 / jnp.sqrt(d_in), 1.0 / jnp.sqrt(d_out), 1.0 / jnp.sqrt(d_emb)
    return {
        # Linear weights stored already transposed to (in, out).
        "w0": jax.random.uniform(ks[0], (d_in, d_out), jnp.float32, -si, si),
        "b0": jax.random.uniform(ks[1], (1, d_out), jnp.float32, -si, si),
        "g0": jnp.ones((1, d_out), jnp.float32),
        "be0": jnp.zeros((1, d_out), jnp.float32),
        "m0": 0.1 * jax.random.normal(ks[2], (1, d_out), jnp.float32),
        "v0": jnp.ones((1, d_out), jnp.float32) + 0.05 * jax.random.uniform(ks[3], (1, d_out)),
        "w1": jax.random.uniform(ks[4], (d_in, d_out), jnp.float32, -si, si),
        "b1": jax.random.uniform(ks[5], (1, d_out), jnp.float32, -si, si),
        "g1": jnp.ones((1, d_out), jnp.float32),
        "be1": jnp.zeros((1, d_out), jnp.float32),
        "m1": 0.1 * jax.random.normal(ks[6], (1, d_out), jnp.float32),
        "v1": jnp.ones((1, d_out), jnp.float32) + 0.05 * jax.random.uniform(ks[7], (1, d_out)),
        # SE layer (bias=False), also stored transposed.
        "wse1": jax.random.uniform(ks[8], (d_out, d_emb), jnp.float32, -so, so),
        "wse2": jax.random.uniform(ks[9], (d_emb, d_out), jnp.float32, -se, se),
    }


if __name__ == "__main__":
    key = jax.random.PRNGKey(0)
    kx, kp, kx2, kp2 = jax.random.split(key, 4)

    # --- case 1: lane-aligned D_out, >=2 grid steps ---
    B, D_IN, D_OUT = 256, 128, 128
    x = jax.random.normal(kx, (B, D_IN), jnp.float32)
    params = init_params(kp, D_IN, D_OUT)
    ref = _reference(x, params)

    prep = prepare_params(params)                       # f32 weights, baked once
    out = jax.block_until_ready(seres_block(x, prep, block_b=128))
    assert out.shape == (B, D_OUT)
    assert jnp.allclose(out, ref, atol=1e-4, rtol=1e-4), "f32 path mismatch"

    # bf16 weights, f32 accumulation + f32 epilogue — relaxed tolerance.
    prep_bf16 = prepare_params(params, use_bf16=True)
    out_bf16 = jax.block_until_ready(seres_block(x, prep_bf16, block_b=128))
    assert jnp.allclose(out_bf16, ref, atol=5e-2, rtol=5e-2), "bf16 weight path mismatch"

    # bf16 output writeback (halves output HBM bytes).
    out_bf16o = jax.block_until_ready(
        seres_block(x, prep_bf16, block_b=128, out_dtype=jnp.bfloat16))
    assert out_bf16o.dtype == jnp.bfloat16
    assert jnp.allclose(out_bf16o.astype(jnp.float32), ref, atol=8e-2, rtol=8e-2)

    # --- case 2: D_out not a multiple of 128 + ragged batch -> padded lane-dense path ---
    B2, D_IN2, D_OUT2 = 100, 64, 64
    x2 = jax.random.normal(kx2, (B2, D_IN2), jnp.float32)
    params2 = init_params(kp2, D_IN2, D_OUT2)
    prep2 = prepare_params(params2)
    out2 = jax.block_until_ready(seres_block(x2, prep2, block_b=64))
    ref2 = _reference(x2, params2)
    assert out2.shape == (B2, D_OUT2)
    assert jnp.allclose(out2, ref2, atol=1e-4, rtol=1e-4), "padded path mismatch"

    print("KERNEL_OK")
</pallas_src>

<mosaic_0001>
module attributes {stable_mosaic.version = 11 : i64} {
  func.func @_seres_kernel(%arg0: i32, %arg1: memref<128x128xf32, #tpu.memory_space<vmem>>, %arg2: memref<128x256xf32, #tpu.memory_space<vmem>>, %arg3: memref<1x256xf32, #tpu.memory_space<vmem>>, %arg4: memref<128x128xf32, #tpu.memory_space<vmem>>, %arg5: memref<128x128xf32, #tpu.memory_space<vmem>>, %arg6: memref<128x128xf32, #tpu.memory_space<vmem>>) attributes {dimension_semantics = [#tpu.dimension_semantics<parallel>], iteration_bounds = array<i64: 2>, scalar_prefetch = 0 : i64, scratch_operands = 0 : i64, tpu.core_type = #tpu.core_type<tc>, window_params = [{transform_indices = @transform_0, window_bounds = array<i64: 128, 128>}, {pipeline_mode = #tpu.pipeline_mode<synchronous>, transform_indices = @transform_1, window_bounds = array<i64: 128, 256>}, {pipeline_mode = #tpu.pipeline_mode<synchronous>, transform_indices = @transform_2, window_bounds = array<i64: 1, 256>}, {pipeline_mode = #tpu.pipeline_mode<synchronous>, transform_indices = @transform_3, window_bounds = array<i64: 128, 128>}, {pipeline_mode = #tpu.pipeline_mode<synchronous>, transform_indices = @transform_4, window_bounds = array<i64: 128, 128>}, {transform_indices = @transform_5, window_bounds = array<i64: 128, 128>}]} {
    %c0 = arith.constant 0 : index
    %c0_0 = arith.constant 0 : index
    %0 = vector.load %arg1[%c0, %c0_0] : memref<128x128xf32, #tpu.memory_space<vmem>>, vector<128x128xf32>
    %c0_1 = arith.constant 0 : index
    %c0_2 = arith.constant 0 : index
    %1 = vector.load %arg2[%c0_1, %c0_2] : memref<128x256xf32, #tpu.memory_space<vmem>>, vector<128x256xf32>
    %cst = arith.constant dense<0.000000e+00> : vector<128x256xf32>
    %2 = tpu.matmul %0, %1, %cst {dimension_numbers = #tpu.dot_dimension_numbers<[1], [0], [0], [1], [0, 0, 1, 1], [], []>} : vector<128x128xf32>, vector<128x256xf32>, vector<128x256xf32> -> vector<128x256xf32>
    %c0_3 = arith.constant 0 : index
    %c0_4 = arith.constant 0 : index
    %3 = vector.load %arg3[%c0_3, %c0_4] : memref<1x256xf32, #tpu.memory_space<vmem>>, vector<1x256xf32>
    %4 = vector.broadcast %3 : vector<1x256xf32> to vector<128x256xf32>
    %5 = arith.addf %2, %4 : vector<128x256xf32>
    %cst_5 = arith.constant 0.000000e+00 : f32
    %6 = vector.broadcast %cst_5 : f32 to vector<128x256xf32>
    %7 = arith.maximumf %5, %6 : vector<128x256xf32>
    %8 = vector.extract_strided_slice %7 {offsets = [0, 0], sizes = [128, 128], strides = [1, 1]} : vector<128x256xf32> to vector<128x128xf32>
    %9 = vector.extract_strided_slice %7 {offsets = [0, 128], sizes = [128, 128], strides = [1, 1]} : vector<128x256xf32> to vector<128x128xf32>
    %c0_6 = arith.constant 0 : index
    %c0_7 = arith.constant 0 : index
    %10 = vector.load %arg4[%c0_6, %c0_7] : memref<128x128xf32, #tpu.memory_space<vmem>>, vector<128x128xf32>
    %cst_8 = arith.constant dense<0.000000e+00> : vector<128x128xf32>
    %11 = tpu.matmul %9, %10, %cst_8 {dimension_numbers = #tpu.dot_dimension_numbers<[1], [0], [0], [1], [0, 0, 1, 1], [], []>} : vector<128x128xf32>, vector<128x128xf32>, vector<128x128xf32> -> vector<128x128xf32>
    %cst_9 = arith.constant 0.000000e+00 : f32
    %12 = vector.broadcast %cst_9 : f32 to vector<128x128xf32>
    %13 = arith.maximumf %11, %12 : vector<128x128xf32>
    %c0_10 = arith.constant 0 : index
    %c0_11 = arith.constant 0 : index
    %14 = vector.load %arg5[%c0_10, %c0_11] : memref<128x128xf32, #tpu.memory_space<vmem>>, vector<128x128xf32>
    %cst_12 = arith.constant dense<0.000000e+00> : vector<128x128xf32>
    %15 = tpu.matmul %13, %14, %cst_12 {dimension_numbers = #tpu.dot_dimension_numbers<[1], [0], [0], [1], [0, 0, 1, 1], [], []>} : vector<128x128xf32>, vector<128x128xf32>, vector<128x128xf32> -> vector<128x128xf32>
    %16 = arith.negf %15 : vector<128x128xf32>
    %17 = math.exp %16 : vector<128x128xf32>
    %cst_13 = arith.constant 1.000000e+00 : f32
    %18 = vector.broadcast %cst_13 : f32 to vector<128x128xf32>
    %19 = arith.addf %18, %17 : vector<128x128xf32>
    %20 = arith.divf %18, %19 : vector<128x128xf32>
    %21 = arith.mulf %20, %9 : vector<128x128xf32>
    %22 = arith.addf %8, %21 : vector<128x128xf32>
    %c0_14 = arith.constant 0 : index
    %c0_15 = arith.constant 0 : index
    %23 = vector.load %arg6[%c0_14, %c0_15] : memref<128x128xf32, #tpu.memory_space<vmem>>, vector<128x128xf32>
    tpu.vector_store %arg6[%c0_14, %c0_15], %22 {strides = array<i32>} : memref<128x128xf32, #tpu.memory_space<vmem>>, vector<128x128xf32>,
    return
  }
  func.func @transform_0(%arg0: i32) -> (i32, i32) {
    %c0_i32 = arith.constant 0 : i32
    %c0_i32_0 = arith.constant 0 : i32
    return %arg0, %c0_i32 : i32, i32
  }
  func.func @transform_1(%arg0: i32) -> (i32, i32) {
    %c0_i32 = arith.constant 0 : i32
    %c0_i32_0 = arith.constant 0 : i32
    %c0_i32_1 = arith.constant 0 : i32
    return %c0_i32, %c0_i32_0 : i32, i32
  }
  func.func @transform_2(%arg0: i32) -> (i32, i32) {
    %c0_i32 = arith.constant 0 : i32
    %c0_i32_0 = arith.constant 0 : i32
    %c0_i32_1 = arith.constant 0 : i32
    return %c0_i32, %c0_i32_0 : i32, i32
  }
  func.func @transform_3(%arg0: i32) -> (i32, i32) {
    %c0_i32 = arith.constant 0 : i32
    %c0_i32_0 = arith.constant 0 : i32
    %c0_i32_1 = arith.constant 0 : i32
    return %c0_i32, %c0_i32_0 : i32, i32
  }
  func.func @transform_4(%arg0: i32) -> (i32, i32) {
    %c0_i32 = arith.constant 0 : i32
    %c0_i32_0 = arith.constant 0 : i32
    %c0_i32_1 = arith.constant 0 : i32
    return %c0_i32, %c0_i32_0 : i32, i32
  }
  func.func @transform_5(%arg0: i32) -> (i32, i32) {
    %c0_i32 = arith.constant 0 : i32
    %c0_i32_0 = arith.constant 0 : i32
    return %arg0, %c0_i32 : i32, i32
  }
}

module attributes {stable_mosaic.version = 11 : i64} {
  func.func @_seres_kernel(%arg0: i32, %arg1: memref<128x128xf32, #tpu.memory_space<vmem>>, %arg2: memref<128x256xf32, #tpu.memory_space<vmem>>, %arg3: memref<1x256xf32, #tpu.memory_space<vmem>>, %arg4: memref<128x128xf32, #tpu.memory_space<vmem>>, %arg5: memref<128x128xf32, #tpu.memory_space<vmem>>, %arg6: memref<128x128xf32, #tpu.memory_space<vmem>>) attributes {dimension_semantics = [#tpu.dimension_semantics<parallel>], iteration_bounds = array<i64: 2>, scalar_prefetch = 0 : i64, scratch_operands = 0 : i64, tpu.core_type = #tpu.core_type<tc>, window_params = [{transform_indices = @transform_0, window_bounds = array<i64: 128, 128>}, {pipeline_mode = #tpu.pipeline_mode<synchronous>, transform_indices = @transform_1, window_bounds = array<i64: 128, 256>}, {pipeline_mode = #tpu.pipeline_mode<synchronous>, transform_indices = @transform_2, window_bounds = array<i64: 1, 256>}, {pipeline_mode = #tpu.pipeline_mode<synchronous>, transform_indices = @transform_3, window_bounds = array<i64: 128, 128>}, {pipeline_mode = #tpu.pipeline_mode<synchronous>, transform_indices = @transform_4, window_bounds = array<i64: 128, 128>}, {transform_indices = @transform_5, window_bounds = array<i64: 128, 128>}]} {
    %c0 = arith.constant 0 : index
    %c0_0 = arith.constant 0 : index
    %0 = vector.load %arg1[%c0, %c0_0] : memref<128x128xf32, #tpu.memory_space<vmem>>, vector<128x128xf32>
    %c0_1 = arith.constant 0 : index
    %c0_2 = arith.constant 0 : index
    %1 = vector.load %arg2[%c0_1, %c0_2] : memref<128x256xf32, #tpu.memory_space<vmem>>, vector<128x256xf32>
    %cst = arith.constant dense<0.000000e+00> : vector<128x256xf32>
    %2 = tpu.matmul %0, %1, %cst {dimension_numbers = #tpu.dot_dimension_numbers<[1], [0], [0], [1], [0, 0, 1, 1], [], []>} : vector<128x128xf32>, vector<128x256xf32>, vector<128x256xf32> -> vector<128x256xf32>
    %c0_3 = arith.constant 0 : index
    %c0_4 = arith.constant 0 : index
    %3 = vector.load %arg3[%c0_3, %c0_4] : memref<1x256xf32, #tpu.memory_space<vmem>>, vector<1x256xf32>
    %4 = vector.broadcast %3 : vector<1x256xf32> to vector<128x256xf32>
    %5 = arith.addf %2, %4 : vector<128x256xf32>
    %cst_5 = arith.constant 0.000000e+00 : f32
    %6 = vector.broadcast %cst_5 : f32 to vector<128x256xf32>
    %7 = arith.maximumf %5, %6 : vector<128x256xf32>
    %8 = vector.extract_strided_slice %7 {offsets = [0, 0], sizes = [128, 128], strides = [1, 1]} : vector<128x256xf32> to vector<128x128xf32>
    %9 = vector.extract_strided_slice %7 {offsets = [0, 128], sizes = [128, 128], strides = [1, 1]} : vector<128x256xf32> to vector<128x128xf32>
    %c0_6 = arith.constant 0 : index
    %c0_7 = arith.constant 0 : index
    %10 = vector.load %arg4[%c0_6, %c0_7] : memref<128x128xf32, #tpu.memory_space<vmem>>, vector<128x128xf32>
    %cst_8 = arith.constant dense<0.000000e+00> : vector<128x128xf32>
    %11 = tpu.matmul %9, %10, %cst_8 {dimension_numbers = #tpu.dot_dimension_numbers<[1], [0], [0], [1], [0, 0, 1, 1], [], []>} : vector<128x128xf32>, vector<128x128xf32>, vector<128x128xf32> -> vector<128x128xf32>
    %cst_9 = arith.constant 0.000000e+00 : f32
    %12 = vector.broadcast %cst_9 : f32 to vector<128x128xf32>
    %13 = arith.maximumf %11, %12 : vector<128x128xf32>
    %c0_10 = arith.constant 0 : index
    %c0_11 = arith.constant 0 : index
    %14 = vector.load %arg5[%c0_10, %c0_11] : memref<128x128xf32, #tpu.memory_space<vmem>>, vector<128x128xf32>
    %cst_12 = arith.constant dense<0.000000e+00> : vector<128x128xf32>
    %15 = tpu.matmul %13, %14, %cst_12 {dimension_numbers = #tpu.dot_dimension_numbers<[1], [0], [0], [1], [0, 0, 1, 1], [], []>} : vector<128x128xf32>, vector<128x128xf32>, vector<128x128xf32> -> vector<128x128xf32>
    %16 = arith.negf %15 : vector<128x128xf32>
    %17 = math.exp %16 : vector<128x128xf32>
    %cst_13 = arith.constant 1.000000e+00 : f32
    %18 = vector.broadcast %cst_13 : f32 to vector<128x128xf32>
    %19 = arith.addf %18, %17 : vector<128x128xf32>
    %20 = arith.divf %18, %19 : vector<128x128xf32>
    %21 = arith.mulf %20, %9 : vector<128x128xf32>
    %22 = arith.addf %8, %21 : vector<128x128xf32>
    %c0_14 = arith.constant 0 : index
    %c0_15 = arith.constant 0 : index
    %23 = vector.load %arg6[%c0_14, %c0_15] : memref<128x128xf32, #tpu.memory_space<vmem>>, vector<128x128xf32>
    tpu.vector_store %arg6[%c0_14, %c0_15], %22 {strides = array<i32>} : memref<128x128xf32, #tpu.memory_space<vmem>>, vector<128x128xf32>,
    return
  }
  func.func @transform_0(%arg0: i32) -> (i32, i32) {
    %c0_i32 = arith.constant 0 : i32
    %c0_i32_0 = arith.constant 0 : i32
    return %arg0, %c0_i32 : i32, i32
  }
  func.func @transform_1(%arg0: i32) -> (i32, i32) {
    %c0_i32 = arith.constant 0 : i32
    %c0_i32_0 = arith.constant 0 : i32
    %c0_i32_1 = arith.constant 0 : i32
    return %c0_i32, %c0_i32_0 : i32, i32
  }
  func.func @transform_2(%arg0: i32) -> (i32, i32) {
    %c0_i32 = arith.constant 0 : i32
    %c0_i32_0 = arith.constant 0 : i32
    %c0_i32_1 = arith.constant 0 : i32
    return %c0_i32, %c0_i32_0 : i32, i32
  }
  func.func @transform_3(%arg0: i32) -> (i32, i32) {
    %c0_i32 = arith.constant 0 : i32
    %c0_i32_0 = arith.constant 0 : i32
    %c0_i32_1 = arith.constant 0 : i32
    return %c0_i32, %c0_i32_0 : i32, i32
  }
  func.func @transform_4(%arg0: i32) -> (i32, i32) {
    %c0_i32 = arith.constant 0 : i32
    %c0_i32_0 = arith.constant 0 : i32
    %c0_i32_1 = arith.constant 0 : i32
    return %c0_i32, %c0_i32_0 : i32, i32
  }
  func.func @transform_5(%arg0: i32) -> (i32, i32) {
    %c0_i32 = arith.constant 0 : i32
    %c0_i32_0 = arith.constant 0 : i32
    return %arg0, %c0_i32 : i32, i32
  }
}

</mosaic_0001>

<llo_original>
// kernel: _seres_forward.1
$region0: #{_seres_forward.1}
  #allocation0 [shape = 'u32[]', space=smem, size = 0x4, offset = 0x4, fixed_abs, tag = 'smem constant byte address 0x4 - core index']
  #allocation1 [shape = 'u32[144,128]{1,0:T(1,128)}', space=vmem, size = 0x12000, scoped, tag = 'internal scratch']
  %s0 = inlined_call_operand.hbm [shape: f32[256,128], index: 0, kind: input, shape index: {}]
  %s1 = inlined_call_operand.hbm [shape: f32[128,256], index: 1, kind: input, shape index: {}]
  %s2 = inlined_call_operand.vmem [shape: f32[1,256], index: 2, kind: input, shape index: {}]
  %s3 = inlined_call_operand.hbm [shape: f32[128,128], index: 3, kind: input, shape index: {}]
  %s4 = inlined_call_operand.hbm [shape: f32[128,128], index: 4, kind: input, shape index: {}]
  %s5 = inlined_call_operand.hbm [shape: f32[256,128], index: 5, kind: output, shape index: {}]
  %s6 = sld [smem:[#allocation0]]
  $region69: #{_seres_forward.1} parent=0
    _
  %s8 = ssub.s32 1, %s6
  %s9 = scalar_select 0, %s8, %s6
  $region1: #{_seres_forward.1} parent=0
    #allocation2 [shape = 'u8[131072]{0}', space=vmem, size = 0x20000, scoped, tag = 'input window, operand 0']
    #allocation3 [shape = 's32[2]{0}', space=sflag, size = 0x8, scoped, tag = 'scoped memory for _seres_forward.1']
    #allocation4 [shape = 's32[2]{0}', space=sflag, size = 0x8, scoped, tag = 'scoped memory for _seres_forward.1']
    #allocation5 [shape = 'u8[131072]{0}', space=vmem, size = 0x20000, scoped, tag = 'input window, operand 1, single buffered']
    #allocation6 [shape = 's32[1]{0}', space=sflag, size = 0x4, scoped, tag = 'scoped memory for _seres_forward.1']
    #allocation7 [shape = 'u8[65536]{0}', space=vmem, size = 0x10000, scoped, tag = 'input window, operand 3, single buffered']
    #allocation8 [shape = 'u8[65536]{0}', space=vmem, size = 0x10000, scoped, tag = 'input window, operand 4, single buffered']
    #allocation9 [shape = 's32[1]{0}', space=sflag, size = 0x4, scoped, tag = 'scoped memory for _seres_forward.1']
    #allocation10 [shape = 'u8[131072]{0}', space=vmem, size = 0x20000, scoped, tag = 'output window, operand 0']
    %10 = vsyncpa [#allocation3], 0
    %s11 = scalar_lea.sflag [#allocation3], 1
    %12 = vsyncpa %s11, 0
    %13 = vsyncpa [#allocation6], 0
    %14 = vsyncpa [#allocation9], 0
    %15 = vsyncpa [#allocation4], 0
    %s16 = scalar_lea.sflag [#allocation4], 1
    %17 = vsyncpa %s16, 0
    loop: start=0, step=1, limit=4
    $region2: #{_seres_forward.1} parent=1 // loop_pre_header
      _
    $region3: #{_seres_forward.1} parent=1 // loop_header
      %s19 = sphi 0, %s23
      %p20 = scmp.ge.s32.totalorder %s19, 4
      %s29 = sphi 0, %s31
      %s32 = sphi 0, %s29
      %s33 = sphi 0, %s32
      %s49 = sphi 0, %s33
      %s53 = sphi 0, %s53
      %s55 = sphi 0, %s53
      %s56 = sphi 0, %s55
      %s70 = sphi 0, %s56
      %s74 = sphi 0, %s74
      %s76 = sphi 0, %s74
      %s77 = sphi 0, %s76
      %s91 = sphi 0, %s77
      %s95 = sphi 0, %s95
      %s97 = sphi 0, %s95
      %s98 = sphi 0, %s97
      %s112 = sphi 0, %s98
      %s116 = sphi 0, %s116
      %s118 = sphi 0, %s116
      %s119 = sphi 0, %s118
      %s133 = sphi 0, %s119
      %s139 = sphi 0, %s141
      %s142 = sphi 0, %s139
      %s143 = sphi 0, %s142
      %s159 = sphi 0, %s143
    $region4: #{_seres_forward.1} parent=1 // loop_header_branch
      %22 = sbr.rel (%p20) target = $region8
    $region5: #{_seres_forward.1} parent=1 // loop_body
      %s24 = ssub.s32 %s19, 1
      %s25 = ssub.s32 %s19, 2
      %s26 = sadd.s32 %s19, 1
      %s27 = ssub.s32 %s19, %s26
      %p28 = scmp.eq.s32.totalorder %s27, 0
      %s30 = sadd.s32 %s29, 1
      %s31 = scalar_select %p28, %s29, %s30
      %p34 = pneg %p28
      %p35 = scmp.eq.s32.totalorder %s19, 1
      %p36 = por %p34, %p35
      %p37 = scmp.ne.s32.totalorder %s29, %s32
      %p38 = scmp.eq.s32.totalorder %s19, 0
      %p39 = por %p37, %p38
      %p40 = scmp.ne.s32.totalorder %s29, %s32
      %p41 = scmp.eq.s32.totalorder %s24, 1
      %p42 = por %p40, %p41
      %p43 = scmp.ne.s32.totalorder %s32, %s33
      %p44 = scmp.eq.s32.totalorder %s24, 0
      %p45 = por %p43, %p44
      %p46 = scmp.ne.s32.totalorder %s32, %s33
      %p47 = scmp.eq.s32.totalorder %s25, 1
      %p48 = por %p46, %p47
      %p50 = scmp.ne.s32.totalorder %s33, %s49
      %p51 = scmp.eq.s32.totalorder %s25, 0
      %p52 = por %p50, %p51
      %s54 = sadd.s32 %s53, 1
      %p57 = scmp.eq.s32.totalorder %s19, 1
      %p58 = scmp.ne.s32.totalorder %s53, %s55
      %p59 = scmp.eq.s32.totalorder %s19, 0
      %p60 = por %p58, %p59
      %p61 = scmp.ne.s32.totalorder %s53, %s55
      %p62 = scmp.eq.s32.totalorder %s24, 1
      %p63 = por %p61, %p62
      %p64 = scmp.ne.s32.totalorder %s55, %s56
      %p65 = scmp.eq.s32.totalorder %s24, 0
      %p66 = por %p64, %p65
      %p67 = scmp.ne.s32.totalorder %s55, %s56
      %p68 = scmp.eq.s32.totalorder %s25, 1
      %p69 = por %p67, %p68
      %p71 = scmp.ne.s32.totalorder %s56, %s70
      %p72 = scmp.eq.s32.totalorder %s25, 0
      %p73 = por %p71, %p72
      %s75 = sadd.s32 %s74, 1
      %p78 = scmp.eq.s32.totalorder %s19, 1
      %p79 = scmp.ne.s32.totalorder %s74, %s76
      %p80 = scmp.eq.s32.totalorder %s19, 0
      %p81 = por %p79, %p80
      %p82 = scmp.ne.s32.totalorder %s74, %s76
      %p83 = scmp.eq.s32.totalorder %s24, 1
      %p84 = por %p82, %p83
      %p85 = scmp.ne.s32.totalorder %s76, %s77
      %p86 = scmp.eq.s32.totalorder %s24, 0
      %p87 = por %p85, %p86
      %p88 = scmp.ne.s32.totalorder %s76, %s77
      %p89 = scmp.eq.s32.totalorder %s25, 1
      %p90 = por %p88, %p89
      %p92 = scmp.ne.s32.totalorder %s77, %s91
      %p93 = scmp.eq.s32.totalorder %s25, 0
      %p94 = por %p92, %p93
      %s96 = sadd.s32 %s95, 1
      %p99 = scmp.eq.s32.totalorder %s19, 1
      %p100 = scmp.ne.s32.totalorder %s95, %s97
      %p101 = scmp.eq.s32.totalorder %s19, 0
      %p102 = por %p100, %p101
      %p103 = scmp.ne.s32.totalorder %s95, %s97
      %p104 = scmp.eq.s32.totalorder %s24, 1
      %p105 = por %p103, %p104
      %p106 = scmp.ne.s32.totalorder %s97, %s98
      %p107 = scmp.eq.s32.totalorder %s24, 0
      %p108 = por %p106, %p107
      %p109 = scmp.ne.s32.totalorder %s97, %s98
      %p110 = scmp.eq.s32.totalorder %s25, 1
      %p111 = por %p109, %p110
      %p113 = scmp.ne.s32.totalorder %s98, %s112
      %p114 = scmp.eq.s32.totalorder %s25, 0
      %p115 = por %p113, %p114
      %s117 = sadd.s32 %s116, 1
      %p120 = scmp.eq.s32.totalorder %s19, 1
      %p121 = scmp.ne.s32.totalorder %s116, %s118
      %p122 = scmp.eq.s32.totalorder %s19, 0
      %p123 = por %p121, %p122
      %p124 = scmp.ne.s32.totalorder %s116, %s118
      %p125 = scmp.eq.s32.totalorder %s24, 1
      %p126 = por %p124, %p125
      %p127 = scmp.ne.s32.totalorder %s118, %s119
      %p128 = scmp.eq.s32.totalorder %s24, 0
      %p129 = por %p127, %p128
      %p130 = scmp.ne.s32.totalorder %s118, %s119
      %p131 = scmp.eq.s32.totalorder %s25, 1
      %p132 = por %p130, %p131
      %p134 = scmp.ne.s32.totalorder %s119, %s133
      %p135 = scmp.eq.s32.totalorder %s25, 0
      %p136 = por %p134, %p135
      %s137 = ssub.s32 %s19, %s26
      %p138 = scmp.eq.s32.totalorder %s137, 0
      %s140 = sadd.s32 %s139, 1
      %s141 = scalar_select %p138, %s139, %s140
      %p144 = pneg %p138
      %p145 = scmp.eq.s32.totalorder %s19, 1
      %p146 = por %p144, %p145
      %p147 = scmp.ne.s32.totalorder %s139, %s142
      %p148 = scmp.eq.s32.totalorder %s19, 0
      %p149 = por %p147, %p148
      %p150 = scmp.ne.s32.totalorder %s139, %s142
      %p151 = scmp.eq.s32.totalorder %s24, 1
      %p152 = por %p150, %p151
      %p153 = scmp.ne.s32.totalorder %s142, %s143
      %p154 = scmp.eq.s32.totalorder %s24, 0
      %p155 = por %p153, %p154
      %p156 = scmp.ne.s32.totalorder %s142, %s143
      %p157 = scmp.eq.s32.totalorder %s25, 1
      %p158 = por %p156, %p157
      %p160 = scmp.ne.s32.totalorder %s143, %s159
      %p161 = scmp.eq.s32.totalorder %s25, 0
      %p162 = por %p160, %p161
      %p163 = scmp.le.s32.totalorder 1, %s19
      %p164 = scmp.lt.s32.totalorder %s19, 3
      %p165 = pnand %p163, %p164
      %p166 = pneg %p165
      // Predicated region
      $region9: #{_seres_forward.1} parent=5 // pred_check
        _
      $region10: #{_seres_forward.1} parent=5 // pred_check_branch
        %168 = sbr.rel (%p165) target = $region12
      $region11: #{_seres_forward.1} parent=5 // pred_region
        %s169 = ssub.s32 %s19, 1
        // Predicated region
        $region13: #{_seres_forward.1} parent=11 // pred_check
          %p170 = pneg %p66
        $region14: #{_seres_forward.1} parent=11 // pred_check_branch
          %172 = sbr.rel (%p170) target = $region16
        $region15: #{_seres_forward.1} parent=11 // pred_region
          %s174 = ssub.s32 4096, 4096
          %175 = vsyncadd [#allocation6], %s174
          %s176 = sshll.u32 [#allocation5], 4
          %s177 = int_to_ptr.vmem [resolvable:$true] %s176
          %182 = dma.hbm_to_vmem [thread:$0]  %s1, 4096, %s177, [#allocation6], 256, 256, 16
        $region16: #{_seres_forward.1} parent=11 // pred_fallthru
          _
        // Predicated region
        $region17: #{_seres_forward.1} parent=11 // pred_check
          %p183 = pneg %p87
        $region18: #{_seres_forward.1} parent=11 // pred_check_branch
          %185 = sbr.rel (%p183) target = $region20
        $region19: #{_seres_forward.1} parent=11 // pred_region
          _
        $region20: #{_seres_forward.1} parent=11 // pred_fallthru
          _
        // Predicated region
        $region21: #{_seres_forward.1} parent=11 // pred_check
          %p186 = pneg %p108
        $region22: #{_seres_forward.1} parent=11 // pred_check_branch
          %188 = sbr.rel (%p186) target = $region24
        $region23: #{_seres_forward.1} parent=11 // pred_region
          %s190 = ssub.s32 2048, 2048
          %191 = vsyncadd [#allocation6], %s190
          %s192 = sshll.u32 [#allocation7], 4
          %s193 = int_to_ptr.vmem [resolvable:$true] %s192
          %198 = dma.hbm_to_vmem [thread:$0]  %s3, 2048, %s193, [#allocation6], 128, 128, 8
        $region24: #{_seres_forward.1} parent=11 // pred_fallthru
          _
        // Predicated region
        $region25: #{_seres_forward.1} parent=11 // pred_check
          %p199 = pneg %p129
        $region26: #{_seres_forward.1} parent=11 // pred_check_branch
          %201 = sbr.rel (%p199) target = $region28
        $region27: #{_seres_forward.1} parent=11 // pred_region
          %s203 = ssub.s32 2048, 2048
          %204 = vsyncadd [#allocation9], %s203
          %s205 = sshll.u32 [#allocation8], 4
          %s206 = int_to_ptr.vmem [resolvable:$true] %s205
          %211 = dma.hbm_to_vmem [thread:$0]  %s4, 2048, %s206, [#allocation9], 128, 128, 8
        $region28: #{_seres_forward.1} parent=11 // pred_fallthru
          _
      $region12: #{_seres_forward.1} parent=5 // pred_fallthru
        _
      %p212 = scmp.lt.s32.totalorder %s19, 2
      // Predicated region
      $region29: #{_seres_forward.1} parent=5 // pred_check
        %p213 = pneg %p212
      $region30: #{_seres_forward.1} parent=5 // pred_check_branch
        %215 = sbr.rel (%p213) target = $region32
      $region31: #{_seres_forward.1} parent=5 // pred_region
        // Predicated region
        $region33: #{_seres_forward.1} parent=31 // pred_check
          %p216 = pneg %p39
        $region34: #{_seres_forward.1} parent=31 // pred_check_branch
          %218 = sbr.rel (%p216) target = $region36
        $region35: #{_seres_forward.1} parent=31 // pred_region
          %s219 = sand.u32 %s29, 1
          %s220 = scalar_lea.sflag [#allocation3], %s219
          %s221 = sand.u32 %s29, 1
          %s222 = smul.addr %s221, 128
          %s223 = scalar_lea.vmem [#allocation2], %s222
          %s224 = smul.u32 16, %s19
          %s226 = ssub.s32 2048, 2048
          %227 = vsyncadd %s220, %s226
          %s228 = smul.addr %s224, 128
          %s229 = scalar_lea.hbm %s0, %s228
          %s230 = sshll.u32 %s223, 4
          %s231 = int_to_ptr.vmem [resolvable:$true] %s230
          %236 = dma.hbm_to_vmem [thread:$0]  %s229, 2048, %s231, %s220, 128, 128, 8
        $region36: #{_seres_forward.1} parent=31 // pred_fallthru
          _
      $region32: #{_seres_forward.1} parent=5 // pred_fallthru
        _
      %p237 = scmp.le.s32.totalorder 1, %s19
      %p238 = scmp.lt.s32.totalorder %s19, 3
      %p239 = pnand %p237, %p238
      %p240 = pneg %p239
      // Predicated region
      $region37: #{_seres_forward.1} parent=5 // pred_check
        _
      $region38: #{_seres_forward.1} parent=5 // pred_check_branch
        %242 = sbr.rel (%p239) target = $region40
      $region39: #{_seres_forward.1} parent=5 // pred_region
        %s243 = ssub.s32 %s19, 1
        %s244 = sand.u32 %s32, 1
        %s245 = scalar_lea.sflag [#allocation3], %s244
        %s246 = sand.u32 %s32, 1
        %s247 = smul.addr %s246, 128
        %s248 = scalar_lea.vmem [#allocation2], %s247
        // Predicated region
        $region41: #{_seres_forward.1} parent=39 // pred_check
          %p249 = pneg %p45
        $region42: #{_seres_forward.1} parent=39 // pred_check_branch
          %251 = sbr.rel (%p249) target = $region44
        $region43: #{_seres_forward.1} parent=39 // pred_region
          %252 = dma.done %s245, 2048
        $region44: #{_seres_forward.1} parent=39 // pred_fallthru
          _
        // Predicated region
        $region45: #{_seres_forward.1} parent=39 // pred_check
          %p253 = pneg %p66
        $region46: #{_seres_forward.1} parent=39 // pred_check_branch
          %255 = sbr.rel (%p253) target = $region48
        $region47: #{_seres_forward.1} parent=39 // pred_region
          %256 = dma.done [#allocation6], 4096
        $region48: #{_seres_forward.1} parent=39 // pred_fallthru
          _
        // Predicated region
        $region49: #{_seres_forward.1} parent=39 // pred_check
          %p257 = pneg %p108
        $region50: #{_seres_forward.1} parent=39 // pred_check_branch
          %259 = sbr.rel (%p257) target = $region52
        $region51: #{_seres_forward.1} parent=39 // pred_region
          %260 = dma.done [#allocation6], 2048
        $region52: #{_seres_forward.1} parent=39 // pred_fallthru
          _
        // Predicated region
        $region53: #{_seres_forward.1} parent=39 // pred_check
          %p261 = pneg %p129
        $region54: #{_seres_forward.1} parent=39 // pred_check_branch
          %263 = sbr.rel (%p261) target = $region56
        $region55: #{_seres_forward.1} parent=39 // pred_region
          %264 = dma.done [#allocation9], 2048
        $region56: #{_seres_forward.1} parent=39 // pred_fallthru
          _
        %s265 = sand.u32 %s32, 1
        %s266 = scalar_lea.sflag [#allocation3], %s265
        %s267 = sand.u32 %s32, 1
        %s268 = smul.addr %s267, 128
        %s269 = scalar_lea.vmem [#allocation2], %s268
        %p270 = pneg %p45
        %p271 = pneg %p42
        %p272 = pneg %p66
        %p273 = pneg %p63
        %p274 = pneg %p87
        %p275 = pneg %p84
        %p276 = pneg %p108
        %p277 = pneg %p105
        %p278 = pneg %p129
        %p279 = pneg %p126
        %p280 = pneg %p155
        %p281 = pneg %p152
        %s282 = sand.u32 %s142, 1
        %s283 = scalar_lea.sflag [#allocation4], %s282
        %s284 = sand.u32 %s142, 1
        %s285 = smul.addr %s284, 128
        %s286 = scalar_lea.vmem [#allocation10], %s285
        %s287 = smul.u32 16, %s24
        %s288 = smul.u32 16, %s24
        %v289 = vld [vmem:[%s248] sm:$0xff]
        %v290 = vld [vmem:[%s248 + $0x8] sm:$0xff]
        %v291 = vld [vmem:[%s248 + $0x10] sm:$0xff]
        %v292 = vld [vmem:[%s248 + $0x18] sm:$0xff]
        %v293 = vld [vmem:[%s248 + $0x20] sm:$0xff]
        %v294 = vld [vmem:[%s248 + $0x28] sm:$0xff]
        %v295 = vld [vmem:[%s248 + $0x30] sm:$0xff]
        %v296 = vld [vmem:[%s248 + $0x38] sm:$0xff]
        %v297 = vld [vmem:[%s248 + $0x40] sm:$0xff]
        %v298 = vld [vmem:[%s248 + $0x48] sm:$0xff]
        %v299 = vld [vmem:[%s248 + $0x50] sm:$0xff]
        %v300 = vld [vmem:[%s248 + $0x58] sm:$0xff]
        %v301 = vld [vmem:[%s248 + $0x60] sm:$0xff]
        %v302 = vld [vmem:[%s248 + $0x68] sm:$0xff]
        %v303 = vld [vmem:[%s248 + $0x70] sm:$0xff]
        %v304 = vld [vmem:[%s248 + $0x78] sm:$0xff]
        %v305 = vld [vmem:[#allocation5] sm:$0xff]
        %v306 = vld [vmem:[#allocation5 + $0x8] sm:$0xff]
        %v307 = vld [vmem:[#allocation5 + $0x10] sm:$0xff]
        %v308 = vld [vmem:[#allocation5 + $0x18] sm:$0xff]
        %v309 = vld [vmem:[#allocation5 + $0x20] sm:$0xff]
        %v310 = vld [vmem:[#allocation5 + $0x28] sm:$0xff]
        %v311 = vld [vmem:[#allocation5 + $0x30] sm:$0xff]
        %v312 = vld [vmem:[#allocation5 + $0x38] sm:$0xff]
        %v313 = vld [vmem:[#allocation5 + $0x40] sm:$0xff]
        %v314 = vld [vmem:[#allocation5 + $0x48] sm:$0xff]
        %v315 = vld [vmem:[#allocation5 + $0x50] sm:$0xff]
        %v316 = vld [vmem:[#allocation5 + $0x58] sm:$0xff]
        %v317 = vld [vmem:[#allocation5 + $0x60] sm:$0xff]
        %v318 = vld [vmem:[#allocation5 + $0x68] sm:$0xff]
        %v319 = vld [vmem:[#allocation5 + $0x70] sm:$0xff]
        %v320 = vld [vmem:[#allocation5 + $0x78] sm:$0xff]
        %v321 = vld [vmem:[#allocation5 + $0x80] sm:$0xff]
        %v322 = vld [vmem:[#allocation5 + $0x88] sm:$0xff]
        %v323 = vld [vmem:[#allocation5 + $0x90] sm:$0xff]
        %v324 = vld [vmem:[#allocation5 + $0x98] sm:$0xff]
        %v325 = vld [vmem:[#allocation5 + $0xa0] sm:$0xff]
        %v326 = vld [vmem:[#allocation5 + $0xa8] sm:$0xff]
        %v327 = vld [vmem:[#allocation5 + $0xb0] sm:$0xff]
        %v328 = vld [vmem:[#allocation5 + $0xb8] sm:$0xff]
        %v329 = vld [vmem:[#allocation5 + $0xc0] sm:$0xff]
        %v330 = vld [vmem:[#allocation5 + $0xc8] sm:$0xff]
        %v331 = vld [vmem:[#allocation5 + $0xd0] sm:$0xff]
        %v332 = vld [vmem:[#allocation5 + $0xd8] sm:$0xff]
        %v333 = vld [vmem:[#allocation5 + $0xe0] sm:$0xff]
        %v334 = vld [vmem:[#allocation5 + $0xe8] sm:$0xff]
        %v335 = vld [vmem:[#allocation5 + $0xf0] sm:$0xff]
        %v336 = vld [vmem:[#allocation5 + $0xf8] sm:$0xff]
        %v337 = vld [vmem:[%s2] sm:$0x3]
        %v339 = vlaneseq
        %v340 = vshrl.u32 %v339, 7
        %v341 = vsub.s32 0, %v340
        %v342 = vrot.slane %v337, %v341
        %v343 = vlaneseq
        %v344 = vshrl.u32 %v343, 7
        %v345 = vsub.s32 1, %v344
        %v346 = vrot.slane %v337, %v345
        %349 = vmatprep.subr.mxu0 %v336
        %350 = vmatpush1.msra.mxu0 %v335
        %351 = vmatprep.subr.mxu0 %v334
        %352 = vmatpush1.msra.mxu0 %v333
        %353 = vmatprep.subr.mxu0 %v332
        %354 = vmatpush1.msra.mxu0 %v331
        %355 = vmatprep.subr.mxu0 %v330
        %356 = vmatpush1.msra.mxu0 %v329
        %357 = vmatprep.subr.mxu0 %v328
        %358 = vmatpush1.msra.mxu0 %v327
        %359 = vmatprep.subr.mxu0 %v326
        %360 = vmatpush1.msra.mxu0 %v325
        %361 = vmatprep.subr.mxu0 %v324
        %362 = vmatpush1.msra.mxu0 %v323
        %363 = vmatprep.subr.mxu0 %v322
        %364 = vmatpush1.msra.mxu0 %v321
        %365 = vmatprep.subr.mxu0 %v320
        %366 = vmatpush1.msra.mxu0 %v319
        %367 = vmatprep.subr.mxu0 %v318
        %368 = vmatpush1.msra.mxu0 %v317
        %369 = vmatprep.subr.mxu0 %v316
        %370 = vmatpush1.msra.mxu0 %v315
        %371 = vmatprep.subr.mxu0 %v314
        %372 = vmatpush1.msra.mxu0 %v313
        %373 = vmatprep.subr.mxu0 %v312
        %374 = vmatpush1.msra.mxu0 %v311
        %375 = vmatprep.subr.mxu0 %v310
        %376 = vmatpush1.msra.mxu0 %v309
        %377 = vmatprep.subr.mxu0 %v308
        %378 = vmatpush1.msra.mxu0 %v307
        %379 = vmatprep.subr.mxu0 %v306
        %380 = vmatpush1.msra.mxu0 %v305
        %381 = vmatprep.subr.mxu0 0.0
        %382 = vmatpush2.msra.mxu0 0.0
        %383 = vmatprep.subr.mxu0 0.0
        %384 = vmatpush2.msra.mxu0 0.0
        %385 = vmatprep.subr.mxu0 0.0
        %386 = vmatpush2.msra.mxu0 0.0
        %387 = vmatprep.subr.mxu0 0.0
        %388 = vmatpush2.msra.mxu0 0.0
        %389 = vmatprep.subr.mxu0 0.0
        %390 = vmatpush2.msra.mxu0 0.0
        %391 = vmatprep.subr.mxu0 0.0
        %392 = vmatpush2.msra.mxu0 0.0
        %393 = vmatprep.subr.mxu0 0.0
        %394 = vmatpush2.msra.mxu0 0.0
        %395 = vmatprep.subr.mxu0 0.0
        %396 = vmatpush2.msra.mxu0 0.0
        %397 = vmatprep.subr.mxu0 0.0
        %398 = vmatpush2.msra.mxu0 0.0
        %399 = vmatprep.subr.mxu0 0.0
        %400 = vmatpush2.msra.mxu0 0.0
        %401 = vmatprep.subr.mxu0 0.0
        %402 = vmatpush2.msra.mxu0 0.0
        %403 = vmatprep.subr.mxu0 0.0
        %404 = vmatpush2.msra.mxu0 0.0
        %405 = vmatprep.subr.mxu0 0.0
        %406 = vmatpush2.msra.mxu0 0.0
        %407 = vmatprep.subr.mxu0 0.0
        %408 = vmatpush2.msra.mxu0 0.0
        %409 = vmatprep.subr.mxu0 0.0
        %410 = vmatpush2.msra.mxu0 0.0
        %411 = vmatprep.subr.mxu0 0.0
        %412 = vmatpush2.msra.mxu0 0.0
        %413 = vmatprep.mubr.f32.mxu0 0.0
        %414 = vmatmul.mubr.f32.gmra.mxu0 %v289
        %v415 = vpop.f32.mrf.mxu0
        %v416 = vadd.f32 %v342, %v415
        %v417 = vpop.f32.mrf.mxu0
        %v418 = vadd.f32 %v346, %v417
        %419 = vmatprep.mubr.f32.mxu0 0.0
        %420 = vmatmul.mubr.f32.gmra.mxu0 %v290
        %v421 = vpop.f32.mrf.mxu0
        %v422 = vadd.f32 %v342, %v421
        %v423 = vpop.f32.mrf.mxu0
        %v424 = vadd.f32 %v346, %v423
        %425 = vmatprep.mubr.f32.mxu0 0.0
        %426 = vmatmul.mubr.f32.gmra.mxu0 %v291
        %v427 = vpop.f32.mrf.mxu0
        %v428 = vadd.f32 %v342, %v427
        %v429 = vpop.f32.mrf.mxu0
        %v430 = vadd.f32 %v346, %v429
        %431 = vmatprep.mubr.f32.mxu0 0.0
        %432 = vmatmul.mubr.f32.gmra.mxu0 %v292
        %v433 = vpop.f32.mrf.mxu0
        %v434 = vadd.f32 %v342, %v433
        %v435 = vpop.f32.mrf.mxu0
        %v436 = vadd.f32 %v346, %v435
        %437 = vmatprep.mubr.f32.mxu0 0.0
        %438 = vmatmul.mubr.f32.gmra.mxu0 %v293
        %v439 = vpop.f32.mrf.mxu0
        %v440 = vadd.f32 %v342, %v439
        %v441 = vpop.f32.mrf.mxu0
        %v442 = vadd.f32 %v346, %v441
        %443 = vmatprep.mubr.f32.mxu0 0.0
        %444 = vmatmul.mubr.f32.gmra.mxu0 %v294
        %v445 = vpop.f32.mrf.mxu0
        %v446 = vadd.f32 %v342, %v445
        %v447 = vpop.f32.mrf.mxu0
        %v448 = vadd.f32 %v346, %v447
        %449 = vmatprep.mubr.f32.mxu0 0.0
        %450 = vmatmul.mubr.f32.gmra.mxu0 %v295
        %v451 = vpop.f32.mrf.mxu0
        %v452 = vadd.f32 %v342, %v451
        %v453 = vpop.f32.mrf.mxu0
        %v454 = vadd.f32 %v346, %v453
        %455 = vmatprep.mubr.f32.mxu0 0.0
        %456 = vmatmul.mubr.f32.gmra.mxu0 %v296
        %v457 = vpop.f32.mrf.mxu0
        %v458 = vadd.f32 %v342, %v457
        %v459 = vpop.f32.mrf.mxu0
        %v460 = vadd.f32 %v346, %v459
        %461 = vmatprep.mubr.f32.mxu0 0.0
        %462 = vmatmul.mubr.f32.gmra.mxu0 %v297
        %v463 = vpop.f32.mrf.mxu0
        %v464 = vadd.f32 %v342, %v463
        %v465 = vpop.f32.mrf.mxu0
        %v466 = vadd.f32 %v346, %v465
        %467 = vmatprep.mubr.f32.mxu0 0.0
        %468 = vmatmul.mubr.f32.gmra.mxu0 %v298
        %v469 = vpop.f32.mrf.mxu0
        %v470 = vadd.f32 %v342, %v469
        %v471 = vpop.f32.mrf.mxu0
        %v472 = vadd.f32 %v346, %v471
        %473 = vmatprep.mubr.f32.mxu0 0.0
        %474 = vmatmul.mubr.f32.gmra.mxu0 %v299
        %v475 = vpop.f32.mrf.mxu0
        %v476 = vadd.f32 %v342, %v475
        %v477 = vpop.f32.mrf.mxu0
        %v478 = vadd.f32 %v346, %v477
        %479 = vmatprep.mubr.f32.mxu0 0.0
        %480 = vmatmul.mubr.f32.gmra.mxu0 %v300
        %v481 = vpop.f32.mrf.mxu0
        %v482 = vadd.f32 %v342, %v481
        %v483 = vpop.f32.mrf.mxu0
        %v484 = vadd.f32 %v346, %v483
        %485 = vmatprep.mubr.f32.mxu0 0.0
        %486 = vmatmul.mubr.f32.gmra.mxu0 %v301
        %v487 = vpop.f32.mrf.mxu0
        %v488 = vadd.f32 %v342, %v487
        %v489 = vpop.f32.mrf.mxu0
        %v490 = vadd.f32 %v346, %v489
        %491 = vmatprep.mubr.f32.mxu0 0.0
        %492 = vmatmul.mubr.f32.gmra.mxu0 %v302
        %v493 = vpop.f32.mrf.mxu0
        %v494 = vadd.f32 %v342, %v493
        %v495 = vpop.f32.mrf.mxu0
        %v496 = vadd.f32 %v346, %v495
        %497 = vmatprep.mubr.f32.mxu0 0.0
        %498 = vmatmul.mubr.f32.gmra.mxu0 %v303
        %v499 = vpop.f32.mrf.mxu0
        %v500 = vadd.f32 %v342, %v499
        %v501 = vpop.f32.mrf.mxu0
        %v502 = vadd.f32 %v346, %v501
        %503 = vmatprep.mubr.f32.mxu0 0.0
        %504 = vmatmul.mubr.f32.gmra.mxu0 %v304
        %v505 = vpop.f32.mrf.mxu0
        %v506 = vadd.f32 %v342, %v505
        %v507 = vpop.f32.mrf.mxu0
        %v508 = vadd.f32 %v346, %v507
        %509 = vdwg.mxu0
        %v510 = vmax.f32 %v416, 0.0
        %v511 = vmax.f32 %v418, 0.0
        %v512 = vmax.f32 %v422, 0.0
        %v513 = vmax.f32 %v424, 0.0
        %v514 = vmax.f32 %v428, 0.0
        %v515 = vmax.f32 %v430, 0.0
        %v516 = vmax.f32 %v434, 0.0
        %v517 = vmax.f32 %v436, 0.0
        %v518 = vmax.f32 %v440, 0.0
        %v519 = vmax.f32 %v442, 0.0
        %v520 = vmax.f32 %v446, 0.0
        %v521 = vmax.f32 %v448, 0.0
        %v522 = vmax.f32 %v452, 0.0
        %v523 = vmax.f32 %v454, 0.0
        %v524 = vmax.f32 %v458, 0.0
        %v525 = vmax.f32 %v460, 0.0
        %v526 = vmax.f32 %v464, 0.0
        %v527 = vmax.f32 %v466, 0.0
        %v528 = vmax.f32 %v470, 0.0
        %v529 = vmax.f32 %v472, 0.0
        %v530 = vmax.f32 %v476, 0.0
        %v531 = vmax.f32 %v478, 0.0
        %v532 = vmax.f32 %v482, 0.0
        %v533 = vmax.f32 %v484, 0.0
        %v534 = vmax.f32 %v488, 0.0
        %v535 = vmax.f32 %v490, 0.0
        %v536 = vmax.f32 %v494, 0.0
        %v537 = vmax.f32 %v496, 0.0
        %v538 = vmax.f32 %v500, 0.0
        %v539 = vmax.f32 %v502, 0.0
        %v540 = vmax.f32 %v506, 0.0
        %v541 = vmax.f32 %v508, 0.0
        %v542 = vld [vmem:[#allocation7] sm:$0xff]
        %v543 = vld [vmem:[#allocation7 + $0x8] sm:$0xff]
        %v544 = vld [vmem:[#allocation7 + $0x10] sm:$0xff]
        %v545 = vld [vmem:[#allocation7 + $0x18] sm:$0xff]
        %v546 = vld [vmem:[#allocation7 + $0x20] sm:$0xff]
        %v547 = vld [vmem:[#allocation7 + $0x28] sm:$0xff]
        %v548 = vld [vmem:[#allocation7 + $0x30] sm:$0xff]
        %v549 = vld [vmem:[#allocation7 + $0x38] sm:$0xff]
        %v550 = vld [vmem:[#allocation7 + $0x40] sm:$0xff]
        %v551 = vld [vmem:[#allocation7 + $0x48] sm:$0xff]
        %v552 = vld [vmem:[#allocation7 + $0x50] sm:$0xff]
        %v553 = vld [vmem:[#allocation7 + $0x58] sm:$0xff]
        %v554 = vld [vmem:[#allocation7 + $0x60] sm:$0xff]
        %v555 = vld [vmem:[#allocation7 + $0x68] sm:$0xff]
        %v556 = vld [vmem:[#allocation7 + $0x70] sm:$0xff]
        %v557 = vld [vmem:[#allocation7 + $0x78] sm:$0xff]
        %558 = vmatprep.subr.mxu0 0.0
        %559 = vmatpush1.msra.mxu0 %v557
        %560 = vmatprep.subr.mxu0 0.0
        %561 = vmatpush1.msra.mxu0 %v556
        %562 = vmatprep.subr.mxu0 0.0
        %563 = vmatpush1.msra.mxu0 %v555
        %564 = vmatprep.subr.mxu0 0.0
        %565 = vmatpush1.msra.mxu0 %v554
        %566 = vmatprep.subr.mxu0 0.0
        %567 = vmatpush1.msra.mxu0 %v553
        %568 = vmatprep.subr.mxu0 0.0
        %569 = vmatpush1.msra.mxu0 %v552
        %570 = vmatprep.subr.mxu0 0.0
        %571 = vmatpush1.msra.mxu0 %v551
        %572 = vmatprep.subr.mxu0 0.0
        %573 = vmatpush1.msra.mxu0 %v550
        %574 = vmatprep.subr.mxu0 0.0
        %575 = vmatpush1.msra.mxu0 %v549
        %576 = vmatprep.subr.mxu0 0.0
        %577 = vmatpush1.msra.mxu0 %v548
        %578 = vmatprep.subr.mxu0 0.0
        %579 = vmatpush1.msra.mxu0 %v547
        %580 = vmatprep.subr.mxu0 0.0
        %581 = vmatpush1.msra.mxu0 %v546
        %582 = vmatprep.subr.mxu0 0.0
        %583 = vmatpush1.msra.mxu0 %v545
        %584 = vmatprep.subr.mxu0 0.0
        %585 = vmatpush1.msra.mxu0 %v544
        %586 = vmatprep.subr.mxu0 0.0
        %587 = vmatpush1.msra.mxu0 %v543
        %588 = vmatprep.subr.mxu0 0.0
        %589 = vmatpush1.msra.mxu0 %v542
        %590 = vmatprep.subr.mxu0 0.0
        %591 = vmatpush2.msra.mxu0 0.0
        %592 = vmatprep.subr.mxu0 0.0
        %593 = vmatpush2.msra.mxu0 0.0
        %594 = vmatprep.subr.mxu0 0.0
        %595 = vmatpush2.msra.mxu0 0.0
        %596 = vmatprep.subr.mxu0 0.0
        %597 = vmatpush2.msra.mxu0 0.0
        %598 = vmatprep.subr.mxu0 0.0
        %599 = vmatpush2.msra.mxu0 0.0
        %600 = vmatprep.subr.mxu0 0.0
        %601 = vmatpush2.msra.mxu0 0.0
        %602 = vmatprep.subr.mxu0 0.0
        %603 = vmatpush2.msra.mxu0 0.0
        %604 = vmatprep.subr.mxu0 0.0
        %605 = vmatpush2.msra.mxu0 0.0
        %606 = vmatprep.subr.mxu0 0.0
        %607 = vmatpush2.msra.mxu0 0.0
        %608 = vmatprep.subr.mxu0 0.0
        %609 = vmatpush2.msra.mxu0 0.0
        %610 = vmatprep.subr.mxu0 0.0
        %611 = vmatpush2.msra.mxu0 0.0
        %612 = vmatprep.subr.mxu0 0.0
        %613 = vmatpush2.msra.mxu0 0.0
        %614 = vmatprep.subr.mxu0 0.0
        %615 = vmatpush2.msra.mxu0 0.0
        %616 = vmatprep.subr.mxu0 0.0
        %617 = vmatpush2.msra.mxu0 0.0
        %618 = vmatprep.subr.mxu0 0.0
        %619 = vmatpush2.msra.mxu0 0.0
        %620 = vmatprep.subr.mxu0 0.0
        %621 = vmatpush2.msra.mxu0 0.0
        %622 = vmatprep.mubr.f32.mxu0 0.0
        %623 = vmatmul.mubr.f32.gmra.mxu0 %v511
        %v624 = vpop.f32.mrf.mxu0
        %v625 = vadd.f32 0.0, %v624
        %v626 = vpop.f32.mrf.mxu0
        %627 = vmatprep.mubr.f32.mxu0 0.0
        %628 = vmatmul.mubr.f32.gmra.mxu0 %v513
        %v629 = vpop.f32.mrf.mxu0
        %v630 = vadd.f32 0.0, %v629
        %v631 = vpop.f32.mrf.mxu0
        %632 = vmatprep.mubr.f32.mxu0 0.0
        %633 = vmatmul.mubr.f32.gmra.mxu0 %v515
        %v634 = vpop.f32.mrf.mxu0
        %v635 = vadd.f32 0.0, %v634
        %v636 = vpop.f32.mrf.mxu0
        %637 = vmatprep.mubr.f32.mxu0 0.0
        %638 = vmatmul.mubr.f32.gmra.mxu0 %v517
        %v639 = vpop.f32.mrf.mxu0
        %v640 = vadd.f32 0.0, %v639
        %v641 = vpop.f32.mrf.mxu0
        %642 = vmatprep.mubr.f32.mxu0 0.0
        %643 = vmatmul.mubr.f32.gmra.mxu0 %v519
        %v644 = vpop.f32.mrf.mxu0
        %v645 = vadd.f32 0.0, %v644
        %v646 = vpop.f32.mrf.mxu0
        %647 = vmatprep.mubr.f32.mxu0 0.0
        %648 = vmatmul.mubr.f32.gmra.mxu0 %v521
        %v649 = vpop.f32.mrf.mxu0
        %v650 = vadd.f32 0.0, %v649
        %v651 = vpop.f32.mrf.mxu0
        %652 = vmatprep.mubr.f32.mxu0 0.0
        %653 = vmatmul.mubr.f32.gmra.mxu0 %v523
        %v654 = vpop.f32.mrf.mxu0
        %v655 = vadd.f32 0.0, %v654
        %v656 = vpop.f32.mrf.mxu0
        %657 = vmatprep.mubr.f32.mxu0 0.0
        %658 = vmatmul.mubr.f32.gmra.mxu0 %v525
        %v659 = vpop.f32.mrf.mxu0
        %v660 = vadd.f32 0.0, %v659
        %v661 = vpop.f32.mrf.mxu0
        %662 = vmatprep.mubr.f32.mxu0 0.0
        %663 = vmatmul.mubr.f32.gmra.mxu0 %v527
        %v664 = vpop.f32.mrf.mxu0
        %v665 = vadd.f32 0.0, %v664
        %v666 = vpop.f32.mrf.mxu0
        %667 = vmatprep.mubr.f32.mxu0 0.0
        %668 = vmatmul.mubr.f32.gmra.mxu0 %v529
        %v669 = vpop.f32.mrf.mxu0
        %v670 = vadd.f32 0.0, %v669
        %v671 = vpop.f32.mrf.mxu0
        %672 = vmatprep.mubr.f32.mxu0 0.0
        %673 = vmatmul.mubr.f32.gmra.mxu0 %v531
        %v674 = vpop.f32.mrf.mxu0
        %v675 = vadd.f32 0.0, %v674
        %v676 = vpop.f32.mrf.mxu0
        %677 = vmatprep.mubr.f32.mxu0 0.0
        %678 = vmatmul.mubr.f32.gmra.mxu0 %v533
        %v679 = vpop.f32.mrf.mxu0
        %v680 = vadd.f32 0.0, %v679
        %v681 = vpop.f32.mrf.mxu0
        %682 = vmatprep.mubr.f32.mxu0 0.0
        %683 = vmatmul.mubr.f32.gmra.mxu0 %v535
        %v684 = vpop.f32.mrf.mxu0
        %v685 = vadd.f32 0.0, %v684
        %v686 = vpop.f32.mrf.mxu0
        %687 = vmatprep.mubr.f32.mxu0 0.0
        %688 = vmatmul.mubr.f32.gmra.mxu0 %v537
        %v689 = vpop.f32.mrf.mxu0
        %v690 = vadd.f32 0.0, %v689
        %v691 = vpop.f32.mrf.mxu0
        %692 = vmatprep.mubr.f32.mxu0 0.0
        %693 = vmatmul.mubr.f32.gmra.mxu0 %v539
        %v694 = vpop.f32.mrf.mxu0
        %v695 = vadd.f32 0.0, %v694
        %v696 = vpop.f32.mrf.mxu0
        %697 = vmatprep.mubr.f32.mxu0 0.0
        %698 = vmatmul.mubr.f32.gmra.mxu0 %v541
        %v699 = vpop.f32.mrf.mxu0
        %v700 = vadd.f32 0.0, %v699
        %v701 = vpop.f32.mrf.mxu0
        %702 = vdwg.mxu0
        %v703 = vmax.f32 %v625, 0.0
        %v704 = vmax.f32 %v630, 0.0
        %v705 = vmax.f32 %v635, 0.0
        %v706 = vmax.f32 %v640, 0.0
        %v707 = vmax.f32 %v645, 0.0
        %v708 = vmax.f32 %v650, 0.0
        %v709 = vmax.f32 %v655, 0.0
        %v710 = vmax.f32 %v660, 0.0
        %v711 = vmax.f32 %v665, 0.0
        %v712 = vmax.f32 %v670, 0.0
        %v713 = vmax.f32 %v675, 0.0
        %v714 = vmax.f32 %v680, 0.0
        %v715 = vmax.f32 %v685, 0.0
        %v716 = vmax.f32 %v690, 0.0
        %v717 = vmax.f32 %v695, 0.0
        %v718 = vmax.f32 %v700, 0.0
        %v719 = vld [vmem:[#allocation8] sm:$0xff]
        %v720 = vld [vmem:[#allocation8 + $0x8] sm:$0xff]
        %v721 = vld [vmem:[#allocation8 + $0x10] sm:$0xff]
        %v722 = vld [vmem:[#allocation8 + $0x18] sm:$0xff]
        %v723 = vld [vmem:[#allocation8 + $0x20] sm:$0xff]
        %v724 = vld [vmem:[#allocation8 + $0x28] sm:$0xff]
        %v725 = vld [vmem:[#allocation8 + $0x30] sm:$0xff]
        %v726 = vld [vmem:[#allocation8 + $0x38] sm:$0xff]
        %v727 = vld [vmem:[#allocation8 + $0x40] sm:$0xff]
        %v728 = vld [vmem:[#allocation8 + $0x48] sm:$0xff]
        %v729 = vld [vmem:[#allocation8 + $0x50] sm:$0xff]
        %v730 = vld [vmem:[#allocation8 + $0x58] sm:$0xff]
        %v731 = vld [vmem:[#allocation8 + $0x60] sm:$0xff]
        %v732 = vld [vmem:[#allocation8 + $0x68] sm:$0xff]
        %v733 = vld [vmem:[#allocation8 + $0x70] sm:$0xff]
        %v734 = vld [vmem:[#allocation8 + $0x78] sm:$0xff]
        %735 = vmatprep.subr.mxu0 0.0
        %736 = vmatpush1.msra.mxu0 %v734
        %737 = vmatprep.subr.mxu0 0.0
        %738 = vmatpush1.msra.mxu0 %v733
        %739 = vmatprep.subr.mxu0 0.0
        %740 = vmatpush1.msra.mxu0 %v732
        %741 = vmatprep.subr.mxu0 0.0
        %742 = vmatpush1.msra.mxu0 %v731
        %743 = vmatprep.subr.mxu0 0.0
        %744 = vmatpush1.msra.mxu0 %v730
        %745 = vmatprep.subr.mxu0 0.0
        %746 = vmatpush1.msra.mxu0 %v729
        %747 = vmatprep.subr.mxu0 0.0
        %748 = vmatpush1.msra.mxu0 %v728
        %749 = vmatprep.subr.mxu0 0.0
        %750 = vmatpush1.msra.mxu0 %v727
        %751 = vmatprep.subr.mxu0 0.0
        %752 = vmatpush1.msra.mxu0 %v726
        %753 = vmatprep.subr.mxu0 0.0
        %754 = vmatpush1.msra.mxu0 %v725
        %755 = vmatprep.subr.mxu0 0.0
        %756 = vmatpush1.msra.mxu0 %v724
        %757 = vmatprep.subr.mxu0 0.0
        %758 = vmatpush1.msra.mxu0 %v723
        %759 = vmatprep.subr.mxu0 0.0
        %760 = vmatpush1.msra.mxu0 %v722
        %761 = vmatprep.subr.mxu0 0.0
        %762 = vmatpush1.msra.mxu0 %v721
        %763 = vmatprep.subr.mxu0 0.0
        %764 = vmatpush1.msra.mxu0 %v720
        %765 = vmatprep.subr.mxu0 0.0
        %766 = vmatpush1.msra.mxu0 %v719
        %767 = vmatprep.subr.mxu0 0.0
        %768 = vmatpush2.msra.mxu0 0.0
        %769 = vmatprep.subr.mxu0 0.0
        %770 = vmatpush2.msra.mxu0 0.0
        %771 = vmatprep.subr.mxu0 0.0
        %772 = vmatpush2.msra.mxu0 0.0
        %773 = vmatprep.subr.mxu0 0.0
        %774 = vmatpush2.msra.mxu0 0.0
        %775 = vmatprep.subr.mxu0 0.0
        %776 = vmatpush2.msra.mxu0 0.0
        %777 = vmatprep.subr.mxu0 0.0
        %778 = vmatpush2.msra.mxu0 0.0
        %779 = vmatprep.subr.mxu0 0.0
        %780 = vmatpush2.msra.mxu0 0.0
        %781 = vmatprep.subr.mxu0 0.0
        %782 = vmatpush2.msra.mxu0 0.0
        %783 = vmatprep.subr.mxu0 0.0
        %784 = vmatpush2.msra.mxu0 0.0
        %785 = vmatprep.subr.mxu0 0.0
        %786 = vmatpush2.msra.mxu0 0.0
        %787 = vmatprep.subr.mxu0 0.0
        %788 = vmatpush2.msra.mxu0 0.0
        %789 = vmatprep.subr.mxu0 0.0
        %790 = vmatpush2.msra.mxu0 0.0
        %791 = vmatprep.subr.mxu0 0.0
        %792 = vmatpush2.msra.mxu0 0.0
        %793 = vmatprep.subr.mxu0 0.0
        %794 = vmatpush2.msra.mxu0 0.0
        %795 = vmatprep.subr.mxu0 0.0
        %796 = vmatpush2.msra.mxu0 0.0
        %797 = vmatprep.subr.mxu0 0.0
        %798 = vmatpush2.msra.mxu0 0.0
        %799 = vmatprep.mubr.f32.mxu0 0.0
        %800 = vmatmul.mubr.f32.gmra.mxu0 %v703
        %v801 = vpop.f32.mrf.mxu0
        %v802 = vadd.f32 0.0, %v801
        %v803 = vpop.f32.mrf.mxu0
        %804 = vmatprep.mubr.f32.mxu0 0.0
        %805 = vmatmul.mubr.f32.gmra.mxu0 %v704
        %v806 = vpop.f32.mrf.mxu0
        %v807 = vadd.f32 0.0, %v806
        %v808 = vpop.f32.mrf.mxu0
        %809 = vmatprep.mubr.f32.mxu0 0.0
        %810 = vmatmul.mubr.f32.gmra.mxu0 %v705
        %v811 = vpop.f32.mrf.mxu0
        %v812 = vadd.f32 0.0, %v811
        %v813 = vpop.f32.mrf.mxu0
        %814 = vmatprep.mubr.f32.mxu0 0.0
        %815 = vmatmul.mubr.f32.gmra.mxu0 %v706
        %v816 = vpop.f32.mrf.mxu0
        %v817 = vadd.f32 0.0, %v816
        %v818 = vpop.f32.mrf.mxu0
        %819 = vmatprep.mubr.f32.mxu0 0.0
        %820 = vmatmul.mubr.f32.gmra.mxu0 %v707
        %v821 = vpop.f32.mrf.mxu0
        %v822 = vadd.f32 0.0, %v821
        %v823 = vpop.f32.mrf.mxu0
        %824 = vmatprep.mubr.f32.mxu0 0.0
        %825 = vmatmul.mubr.f32.gmra.mxu0 %v708
        %v826 = vpop.f32.mrf.mxu0
        %v827 = vadd.f32 0.0, %v826
        %v828 = vpop.f32.mrf.mxu0
        %829 = vmatprep.mubr.f32.mxu0 0.0
        %830 = vmatmul.mubr.f32.gmra.mxu0 %v709
        %v831 = vpop.f32.mrf.mxu0
        %v832 = vadd.f32 0.0, %v831
        %v833 = vpop.f32.mrf.mxu0
        %834 = vmatprep.mubr.f32.mxu0 0.0
        %835 = vmatmul.mubr.f32.gmra.mxu0 %v710
        %v836 = vpop.f32.mrf.mxu0
        %v837 = vadd.f32 0.0, %v836
        %v838 = vpop.f32.mrf.mxu0
        %839 = vmatprep.mubr.f32.mxu0 0.0
        %840 = vmatmul.mubr.f32.gmra.mxu0 %v711
        %v841 = vpop.f32.mrf.mxu0
        %v842 = vadd.f32 0.0, %v841
        %v843 = vpop.f32.mrf.mxu0
        %844 = vmatprep.mubr.f32.mxu0 0.0
        %845 = vmatmul.mubr.f32.gmra.mxu0 %v712
        %v846 = vpop.f32.mrf.mxu0
        %v847 = vadd.f32 0.0, %v846
        %v848 = vpop.f32.mrf.mxu0
        %849 = vmatprep.mubr.f32.mxu0 0.0
        %850 = vmatmul.mubr.f32.gmra.mxu0 %v713
        %v851 = vpop.f32.mrf.mxu0
        %v852 = vadd.f32 0.0, %v851
        %v853 = vpop.f32.mrf.mxu0
        %854 = vmatprep.mubr.f32.mxu0 0.0
        %855 = vmatmul.mubr.f32.gmra.mxu0 %v714
        %v856 = vpop.f32.mrf.mxu0
        %v857 = vadd.f32 0.0, %v856
        %v858 = vpop.f32.mrf.mxu0
        %859 = vmatprep.mubr.f32.mxu0 0.0
        %860 = vmatmul.mubr.f32.gmra.mxu0 %v715
        %v861 = vpop.f32.mrf.mxu0
        %v862 = vadd.f32 0.0, %v861
        %v863 = vpop.f32.mrf.mxu0
        %864 = vmatprep.mubr.f32.mxu0 0.0
        %865 = vmatmul.mubr.f32.gmra.mxu0 %v716
        %v866 = vpop.f32.mrf.mxu0
        %v867 = vadd.f32 0.0, %v866
        %v868 = vpop.f32.mrf.mxu0
        %869 = vmatprep.mubr.f32.mxu0 0.0
        %870 = vmatmul.mubr.f32.gmra.mxu0 %v717
        %v871 = vpop.f32.mrf.mxu0
        %v872 = vadd.f32 0.0, %v871
        %v873 = vpop.f32.mrf.mxu0
        %874 = vmatprep.mubr.f32.mxu0 0.0
        %875 = vmatmul.mubr.f32.gmra.mxu0 %v718
        %v876 = vpop.f32.mrf.mxu0
        %v877 = vadd.f32 0.0, %v876
        %v878 = vpop.f32.mrf.mxu0
        %879 = vdwg.mxu0
        %v880 = vxor.u32 %v802, 2147483648
        %v881 = vxor.u32 %v807, 2147483648
        %v882 = vxor.u32 %v812, 2147483648
        %v883 = vxor.u32 %v817, 2147483648
        %v884 = vxor.u32 %v822, 2147483648
        %v885 = vxor.u32 %v827, 2147483648
        %v886 = vxor.u32 %v832, 2147483648
        %v887 = vxor.u32 %v837, 2147483648
        %v888 = vxor.u32 %v842, 2147483648
        %v889 = vxor.u32 %v847, 2147483648
        %v890 = vxor.u32 %v852, 2147483648
        %v891 = vxor.u32 %v857, 2147483648
        %v892 = vxor.u32 %v862, 2147483648
        %v893 = vxor.u32 %v867, 2147483648
        %v894 = vxor.u32 %v872, 2147483648
        %v895 = vxor.u32 %v877, 2147483648
        %v896 = vmul.f32 %v880, 1.442695
        %v897 = vpow.pop %v896
        %v898 = vmul.f32 %v881, 1.442695
        %v899 = vpow.pop %v898
        %v900 = vmul.f32 %v882, 1.442695
        %v901 = vpow.pop %v900
        %v902 = vmul.f32 %v883, 1.442695
        %v903 = vpow.pop %v902
        %v904 = vmul.f32 %v884, 1.442695
        %v905 = vpow.pop %v904
        %v906 = vmul.f32 %v885, 1.442695
        %v907 = vpow.pop %v906
        %v908 = vmul.f32 %v886, 1.442695
        %v909 = vpow.pop %v908
        %v910 = vmul.f32 %v887, 1.442695
        %v911 = vpow.pop %v910
        %v912 = vmul.f32 %v888, 1.442695
        %v913 = vpow.pop %v912
        %v914 = vmul.f32 %v889, 1.442695
        %v915 = vpow.pop %v914
        %v916 = vmul.f32 %v890, 1.442695
        %v917 = vpow.pop %v916
        %v918 = vmul.f32 %v891, 1.442695
        %v919 = vpow.pop %v918
        %v920 = vmul.f32 %v892, 1.442695
        %v921 = vpow.pop %v920
        %v922 = vmul.f32 %v893, 1.442695
        %v923 = vpow.pop %v922
        %v924 = vmul.f32 %v894, 1.442695
        %v925 = vpow.pop %v924
        %v926 = vmul.f32 %v895, 1.442695
        %v927 = vpow.pop %v926
        %v928 = vadd.f32 %v897, 1.0
        %v929 = vadd.f32 %v899, 1.0
        %v930 = vadd.f32 %v901, 1.0
        %v931 = vadd.f32 %v903, 1.0
        %v932 = vadd.f32 %v905, 1.0
        %v933 = vadd.f32 %v907, 1.0
        %v934 = vadd.f32 %v909, 1.0
        %v935 = vadd.f32 %v911, 1.0
        %v936 = vadd.f32 %v913, 1.0
        %v937 = vadd.f32 %v915, 1.0
        %v938 = vadd.f32 %v917, 1.0
        %v939 = vadd.f32 %v919, 1.0
        %v940 = vadd.f32 %v921, 1.0
        %v941 = vadd.f32 %v923, 1.0
        %v942 = vadd.f32 %v925, 1.0
        %v943 = vadd.f32 %v927, 1.0
        %v944 = vrcp.pop %v928
        %v945 = vmul.f32 1.0, %v944
        %v946 = vrcp.pop %v929
        %v947 = vmul.f32 1.0, %v946
        %v948 = vrcp.pop %v930
        %v949 = vmul.f32 1.0, %v948
        %v950 = vrcp.pop %v931
        %v951 = vmul.f32 1.0, %v950
        %v952 = vrcp.pop %v932
        %v953 = vmul.f32 1.0, %v952
        %v954 = vrcp.pop %v933
        %v955 = vmul.f32 1.0, %v954
        %v956 = vrcp.pop %v934
        %v957 = vmul.f32 1.0, %v956
        %v958 = vrcp.pop %v935
        %v959 = vmul.f32 1.0, %v958
        %v960 = vrcp.pop %v936
        %v961 = vmul.f32 1.0, %v960
        %v962 = vrcp.pop %v937
        %v963 = vmul.f32 1.0, %v962
        %v964 = vrcp.pop %v938
        %v965 = vmul.f32 1.0, %v964
        %v966 = vrcp.pop %v939
        %v967 = vmul.f32 1.0, %v966
        %v968 = vrcp.pop %v940
        %v969 = vmul.f32 1.0, %v968
        %v970 = vrcp.pop %v941
        %v971 = vmul.f32 1.0, %v970
        %v972 = vrcp.pop %v942
        %v973 = vmul.f32 1.0, %v972
        %v974 = vrcp.pop %v943
        %v975 = vmul.f32 1.0, %v974
        %v976 = vmul.f32 %v945, %v511
        %v977 = vmul.f32 %v947, %v513
        %v978 = vmul.f32 %v949, %v515
        %v979 = vmul.f32 %v951, %v517
        %v980 = vmul.f32 %v953, %v519
        %v981 = vmul.f32 %v955, %v521
        %v982 = vmul.f32 %v957, %v523
        %v983 = vmul.f32 %v959, %v525
        %v984 = vmul.f32 %v961, %v527
        %v985 = vmul.f32 %v963, %v529
        %v986 = vmul.f32 %v965, %v531
        %v987 = vmul.f32 %v967, %v533
        %v988 = vmul.f32 %v969, %v535
        %v989 = vmul.f32 %v971, %v537
        %v990 = vmul.f32 %v973, %v539
        %v991 = vmul.f32 %v975, %v541
        %v992 = vadd.f32 %v510, %v976
        %v993 = vadd.f32 %v512, %v977
        %v994 = vadd.f32 %v514, %v978
        %v995 = vadd.f32 %v516, %v979
        %v996 = vadd.f32 %v518, %v980
        %v997 = vadd.f32 %v520, %v981
        %v998 = vadd.f32 %v522, %v982
        %v999 = vadd.f32 %v524, %v983
        %v1000 = vadd.f32 %v526, %v984
        %v1001 = vadd.f32 %v528, %v985
        %v1002 = vadd.f32 %v530, %v986
        %v1003 = vadd.f32 %v532, %v987
        %v1004 = vadd.f32 %v534, %v988
        %v1005 = vadd.f32 %v536, %v989
        %v1006 = vadd.f32 %v538, %v990
        %v1007 = vadd.f32 %v540, %v991
        %1008 = vst [vmem:[%s286] sm:$0xff] %v992
        %1009 = vst [vmem:[%s286 + $0x8] sm:$0xff] %v993
        %1010 = vst [vmem:[%s286 + $0x10] sm:$0xff] %v994
        %1011 = vst [vmem:[%s286 + $0x18] sm:$0xff] %v995
        %1012 = vst [vmem:[%s286 + $0x20] sm:$0xff] %v996
        %1013 = vst [vmem:[%s286 + $0x28] sm:$0xff] %v997
        %1014 = vst [vmem:[%s286 + $0x30] sm:$0xff] %v998
        %1015 = vst [vmem:[%s286 + $0x38] sm:$0xff] %v999
        %1016 = vst [vmem:[%s286 + $0x40] sm:$0xff] %v1000
        %1017 = vst [vmem:[%s286 + $0x48] sm:$0xff] %v1001
        %1018 = vst [vmem:[%s286 + $0x50] sm:$0xff] %v1002
        %1019 = vst [vmem:[%s286 + $0x58] sm:$0xff] %v1003
        %1020 = vst [vmem:[%s286 + $0x60] sm:$0xff] %v1004
        %1021 = vst [vmem:[%s286 + $0x68] sm:$0xff] %v1005
        %1022 = vst [vmem:[%s286 + $0x70] sm:$0xff] %v1006
        %1023 = vst [vmem:[%s286 + $0x78] sm:$0xff] %v1007
        %s1024 = sand.u32 %s142, 1
        %s1025 = scalar_lea.sflag [#allocation4], %s1024
        %s1026 = sand.u32 %s142, 1
        %s1027 = smul.addr %s1026, 128
        %s1028 = scalar_lea.vmem [#allocation10], %s1027
        // Predicated region
        $region57: #{_seres_forward.1} parent=39 // pred_check
          %p1029 = pneg %p152
        $region58: #{_seres_forward.1} parent=39 // pred_check_branch
          %1031 = sbr.rel (%p1029) target = $region60
        $region59: #{_seres_forward.1} parent=39 // pred_region
          %s1032 = smul.u32 16, %s24
          %s1034 = ssub.s32 2048, 2048
          %1035 = vsyncadd %s1025, %s1034
          %s1036 = smul.addr %s1032, 128
          %s1037 = scalar_lea.hbm %s5, %s1036
          %s1038 = sshll.u32 %s1028, 4
          %s1039 = int_to_ptr.vmem [resolvable:$true] %s1038
          %1044 = dma.vmem_to_hbm [thread:$0]  %s1039, 2048, %s1037, %s1025, 128, 128, 8
        $region60: #{_seres_forward.1} parent=39 // pred_fallthru
          _
      $region40: #{_seres_forward.1} parent=5 // pred_fallthru
        _
      %p1045 = scmp.le.s32.totalorder 2, %s19
      // Predicated region
      $region61: #{_seres_forward.1} parent=5 // pred_check
        %p1046 = pneg %p1045
      $region62: #{_seres_forward.1} parent=5 // pred_check_branch
        %1048 = sbr.rel (%p1046) target = $region64
      $region63: #{_seres_forward.1} parent=5 // pred_region
        %s1049 = ssub.s32 %s19, 2
        // Predicated region
        $region65: #{_seres_forward.1} parent=63 // pred_check
          %p1050 = pneg %p158
        $region66: #{_seres_forward.1} parent=63 // pred_check_branch
          %1052 = sbr.rel (%p1050) target = $region68
        $region67: #{_seres_forward.1} parent=63 // pred_region
          %s1053 = sand.u32 %s143, 1
          %s1054 = scalar_lea.sflag [#allocation4], %s1053
          %s1055 = sand.u32 %s143, 1
          %s1056 = smul.addr %s1055, 128
          %s1057 = scalar_lea.vmem [#allocation10], %s1056
          %1058 = dma.done %s1054, 2048
        $region68: #{_seres_forward.1} parent=63 // pred_fallthru
          _
      $region64: #{_seres_forward.1} parent=5 // pred_fallthru
        _
    $region6: #{_seres_forward.1} parent=1 // loop_footer
      %s23 = sadd.s32 1, %s19
    $region7: #{_seres_forward.1} parent=1 // loop_footer_branch
      %18 = sbr.rel target = $region3
    $region8: #{_seres_forward.1} parent=1 // loop_exit
      _
    %1059 = vsyncpa [#allocation3], 1
    %s1060 = scalar_lea.sflag [#allocation3], 1
    %1061 = vsyncpa %s1060, 1
    %1062 = vsyncpa [#allocation6], 1
    %1063 = vsyncpa [#allocation9], 1
    %1064 = vsyncpa [#allocation4], 1
    %s1065 = scalar_lea.sflag [#allocation4], 1
    %1066 = vsyncpa %s1065, 1

// kernel: _seres_forward.1
$region0: #{_seres_forward.1}
  #allocation0 [shape = 'u32[]', space=smem, size = 0x4, offset = 0x4, fixed_abs, tag = 'smem constant byte address 0x4 - core index']
  #allocation1 [shape = 'u32[144,128]{1,0:T(1,128)}', space=vmem, size = 0x12000, scoped, tag = 'internal scratch']
  %s0 = inlined_call_operand.hbm [shape: f32[256,128], index: 0, kind: input, shape index: {}]
  %s1 = inlined_call_operand.hbm [shape: f32[128,256], index: 1, kind: input, shape index: {}]
  %s2 = inlined_call_operand.vmem [shape: f32[1,256], index: 2, kind: input, shape index: {}]
  %s3 = inlined_call_operand.hbm [shape: f32[128,128], index: 3, kind: input, shape index: {}]
  %s4 = inlined_call_operand.hbm [shape: f32[128,128], index: 4, kind: input, shape index: {}]
  %s5 = inlined_call_operand.hbm [shape: f32[256,128], index: 5, kind: output, shape index: {}]
  %s6 = sld [smem:[#allocation0]]
  $region69: #{_seres_forward.1} parent=0
    _
  %s8 = ssub.s32 1, %s6
  %s9 = scalar_select 0, %s8, %s6
  $region1: #{_seres_forward.1} parent=0
    #allocation2 [shape = 'u8[131072]{0}', space=vmem, size = 0x20000, scoped, tag = 'input window, operand 0']
    #allocation3 [shape = 's32[2]{0}', space=sflag, size = 0x8, scoped, tag = 'scoped memory for _seres_forward.1']
    #allocation4 [shape = 's32[2]{0}', space=sflag, size = 0x8, scoped, tag = 'scoped memory for _seres_forward.1']
    #allocation5 [shape = 'u8[131072]{0}', space=vmem, size = 0x20000, scoped, tag = 'input window, operand 1, single buffered']
    #allocation6 [shape = 's32[1]{0}', space=sflag, size = 0x4, scoped, tag = 'scoped memory for _seres_forward.1']
    #allocation7 [shape = 'u8[65536]{0}', space=vmem, size = 0x10000, scoped, tag = 'input window, operand 3, single buffered']
    #allocation8 [shape = 'u8[65536]{0}', space=vmem, size = 0x10000, scoped, tag = 'input window, operand 4, single buffered']
    #allocation9 [shape = 's32[1]{0}', space=sflag, size = 0x4, scoped, tag = 'scoped memory for _seres_forward.1']
    #allocation10 [shape = 'u8[131072]{0}', space=vmem, size = 0x20000, scoped, tag = 'output window, operand 0']
    %10 = vsyncpa [#allocation3], 0
    %s11 = scalar_lea.sflag [#allocation3], 1
    %12 = vsyncpa %s11, 0
    %13 = vsyncpa [#allocation6], 0
    %14 = vsyncpa [#allocation9], 0
    %15 = vsyncpa [#allocation4], 0
    %s16 = scalar_lea.sflag [#allocation4], 1
    %17 = vsyncpa %s16, 0
    loop: start=0, step=1, limit=4
    $region2: #{_seres_forward.1} parent=1 // loop_pre_header
      _
    $region3: #{_seres_forward.1} parent=1 // loop_header
      %s19 = sphi 0, %s23
      %p20 = scmp.ge.s32.totalorder %s19, 4
      %s29 = sphi 0, %s31
      %s32 = sphi 0, %s29
      %s33 = sphi 0, %s32
      %s49 = sphi 0, %s33
      %s53 = sphi 0, %s53
      %s55 = sphi 0, %s53
      %s56 = sphi 0, %s55
      %s70 = sphi 0, %s56
      %s74 = sphi 0, %s74
      %s76 = sphi 0, %s74
      %s77 = sphi 0, %s76
      %s91 = sphi 0, %s77
      %s95 = sphi 0, %s95
      %s97 = sphi 0, %s95
      %s98 = sphi 0, %s97
      %s112 = sphi 0, %s98
      %s116 = sphi 0, %s116
      %s118 = sphi 0, %s116
      %s119 = sphi 0, %s118
      %s133 = sphi 0, %s119
      %s139 = sphi 0, %s141
      %s142 = sphi 0, %s139
      %s143 = sphi 0, %s142
      %s159 = sphi 0, %s143
    $region4: #{_seres_forward.1} parent=1 // loop_header_branch
      %22 = sbr.rel (%p20) target = $region8
    $region5: #{_seres_forward.1} parent=1 // loop_body
      %s24 = ssub.s32 %s19, 1
      %s25 = ssub.s32 %s19, 2
      %s26 = sadd.s32 %s19, 1
      %s27 = ssub.s32 %s19, %s26
      %p28 = scmp.eq.s32.totalorder %s27, 0
      %s30 = sadd.s32 %s29, 1
      %s31 = scalar_select %p28, %s29, %s30
      %p34 = pneg %p28
      %p35 = scmp.eq.s32.totalorder %s19, 1
      %p36 = por %p34, %p35
      %p37 = scmp.ne.s32.totalorder %s29, %s32
      %p38 = scmp.eq.s32.totalorder %s19, 0
      %p39 = por %p37, %p38
      %p40 = scmp.ne.s32.totalorder %s29, %s32
      %p41 = scmp.eq.s32.totalorder %s24, 1
      %p42 = por %p40, %p41
      %p43 = scmp.ne.s32.totalorder %s32, %s33
      %p44 = scmp.eq.s32.totalorder %s24, 0
      %p45 = por %p43, %p44
      %p46 = scmp.ne.s32.totalorder %s32, %s33
      %p47 = scmp.eq.s32.totalorder %s25, 1
      %p48 = por %p46, %p47
      %p50 = scmp.ne.s32.totalorder %s33, %s49
      %p51 = scmp.eq.s32.totalorder %s25, 0
      %p52 = por %p50, %p51
      %s54 = sadd.s32 %s53, 1
      %p57 = scmp.eq.s32.totalorder %s19, 1
      %p58 = scmp.ne.s32.totalorder %s53, %s55
      %p59 = scmp.eq.s32.totalorder %s19, 0
      %p60 = por %p58, %p59
      %p61 = scmp.ne.s32.totalorder %s53, %s55
      %p62 = scmp.eq.s32.totalorder %s24, 1
      %p63 = por %p61, %p62
      %p64 = scmp.ne.s32.totalorder %s55, %s56
      %p65 = scmp.eq.s32.totalorder %s24, 0
      %p66 = por %p64, %p65
      %p67 = scmp.ne.s32.totalorder %s55, %s56
      %p68 = scmp.eq.s32.totalorder %s25, 1
      %p69 = por %p67, %p68
      %p71 = scmp.ne.s32.totalorder %s56, %s70
      %p72 = scmp.eq.s32.totalorder %s25, 0
      %p73 = por %p71, %p72
      %s75 = sadd.s32 %s74, 1
      %p78 = scmp.eq.s32.totalorder %s19, 1
      %p79 = scmp.ne.s32.totalorder %s74, %s76
      %p80 = scmp.eq.s32.totalorder %s19, 0
      %p81 = por %p79, %p80
      %p82 = scmp.ne.s32.totalorder %s74, %s76
      %p83 = scmp.eq.s32.totalorder %s24, 1
      %p84 = por %p82, %p83
      %p85 = scmp.ne.s32.totalorder %s76, %s77
      %p86 = scmp.eq.s32.totalorder %s24, 0
      %p87 = por %p85, %p86
      %p88 = scmp.ne.s32.totalorder %s76, %s77
      %p89 = scmp.eq.s32.totalorder %s25, 1
      %p90 = por %p88, %p89
      %p92 = scmp.ne.s32.totalorder %s77, %s91
      %p93 = scmp.eq.s32.totalorder %s25, 0
      %p94 = por %p92, %p93
      %s96 = sadd.s32 %s95, 1
      %p99 = scmp.eq.s32.totalorder %s19, 1
      %p100 = scmp.ne.s32.totalorder %s95, %s97
      %p101 = scmp.eq.s32.totalorder %s19, 0
      %p102 = por %p100, %p101
      %p103 = scmp.ne.s32.totalorder %s95, %s97
      %p104 = scmp.eq.s32.totalorder %s24, 1
      %p105 = por %p103, %p104
      %p106 = scmp.ne.s32.totalorder %s97, %s98
      %p107 = scmp.eq.s32.totalorder %s24, 0
      %p108 = por %p106, %p107
      %p109 = scmp.ne.s32.totalorder %s97, %s98
      %p110 = scmp.eq.s32.totalorder %s25, 1
      %p111 = por %p109, %p110
      %p113 = scmp.ne.s32.totalorder %s98, %s112
      %p114 = scmp.eq.s32.totalorder %s25, 0
      %p115 = por %p113, %p114
      %s117 = sadd.s32 %s116, 1
      %p120 = scmp.eq.s32.totalorder %s19, 1
      %p121 = scmp.ne.s32.totalorder %s116, %s118
      %p122 = scmp.eq.s32.totalorder %s19, 0
      %p123 = por %p121, %p122
      %p124 = scmp.ne.s32.totalorder %s116, %s118
      %p125 = scmp.eq.s32.totalorder %s24, 1
      %p126 = por %p124, %p125
      %p127 = scmp.ne.s32.totalorder %s118, %s119
      %p128 = scmp.eq.s32.totalorder %s24, 0
      %p129 = por %p127, %p128
      %p130 = scmp.ne.s32.totalorder %s118, %s119
      %p131 = scmp.eq.s32.totalorder %s25, 1
      %p132 = por %p130, %p131
      %p134 = scmp.ne.s32.totalorder %s119, %s133
      %p135 = scmp.eq.s32.totalorder %s25, 0
      %p136 = por %p134, %p135
      %s137 = ssub.s32 %s19, %s26
      %p138 = scmp.eq.s32.totalorder %s137, 0
      %s140 = sadd.s32 %s139, 1
      %s141 = scalar_select %p138, %s139, %s140
      %p144 = pneg %p138
      %p145 = scmp.eq.s32.totalorder %s19, 1
      %p146 = por %p144, %p145
      %p147 = scmp.ne.s32.totalorder %s139, %s142
      %p148 = scmp.eq.s32.totalorder %s19, 0
      %p149 = por %p147, %p148
      %p150 = scmp.ne.s32.totalorder %s139, %s142
      %p151 = scmp.eq.s32.totalorder %s24, 1
      %p152 = por %p150, %p151
      %p153 = scmp.ne.s32.totalorder %s142, %s143
      %p154 = scmp.eq.s32.totalorder %s24, 0
      %p155 = por %p153, %p154
      %p156 = scmp.ne.s32.totalorder %s142, %s143
      %p157 = scmp.eq.s32.totalorder %s25, 1
      %p158 = por %p156, %p157
      %p160 = scmp.ne.s32.totalorder %s143, %s159
      %p161 = scmp.eq.s32.totalorder %s25, 0
      %p162 = por %p160, %p161
      %p163 = scmp.le.s32.totalorder 1, %s19
      %p164 = scmp.lt.s32.totalorder %s19, 3
      %p165 = pnand %p163, %p164
      %p166 = pneg %p165
      // Predicated region
      $region9: #{_seres_forward.1} parent=5 // pred_check
        _
      $region10: #{_seres_forward.1} parent=5 // pred_check_branch
        %168 = sbr.rel (%p165) target = $region12
      $region11: #{_seres_forward.1} parent=5 // pred_region
        %s169 = ssub.s32 %s19, 1
        // Predicated region
        $region13: #{_seres_forward.1} parent=11 // pred_check
          %p170 = pneg %p66
        $region14: #{_seres_forward.1} parent=11 // pred_check_branch
          %172 = sbr.rel (%p170) target = $region16
        $region15: #{_seres_forward.1} parent=11 // pred_region
          %s174 = ssub.s32 4096, 4096
          %175 = vsyncadd [#allocation6], %s174
          %s176 = sshll.u32 [#allocation5], 4
          %s177 = int_to_ptr.vmem [resolvable:$true] %s176
          %182 = dma.hbm_to_vmem [thread:$0]  %s1, 4096, %s177, [#allocation6], 256, 256, 16
        $region16: #{_seres_forward.1} parent=11 // pred_fallthru
          _
        // Predicated region
        $region17: #{_seres_forward.1} parent=11 // pred_check
          %p183 = pneg %p87
        $region18: #{_seres_forward.1} parent=11 // pred_check_branch
          %185 = sbr.rel (%p183) target = $region20
        $region19: #{_seres_forward.1} parent=11 // pred_region
          _
        $region20: #{_seres_forward.1} parent=11 // pred_fallthru
          _
        // Predicated region
        $region21: #{_seres_forward.1} parent=11 // pred_check
          %p186 = pneg %p108
        $region22: #{_seres_forward.1} parent=11 // pred_check_branch
          %188 = sbr.rel (%p186) target = $region24
        $region23: #{_seres_forward.1} parent=11 // pred_region
          %s190 = ssub.s32 2048, 2048
          %191 = vsyncadd [#allocation6], %s190
          %s192 = sshll.u32 [#allocation7], 4
          %s193 = int_to_ptr.vmem [resolvable:$true] %s192
          %198 = dma.hbm_to_vmem [thread:$0]  %s3, 2048, %s193, [#allocation6], 128, 128, 8
        $region24: #{_seres_forward.1} parent=11 // pred_fallthru
          _
        // Predicated region
        $region25: #{_seres_forward.1} parent=11 // pred_check
          %p199 = pneg %p129
        $region26: #{_seres_forward.1} parent=11 // pred_check_branch
          %201 = sbr.rel (%p199) target = $region28
        $region27: #{_seres_forward.1} parent=11 // pred_region
          %s203 = ssub.s32 2048, 2048
          %204 = vsyncadd [#allocation9], %s203
          %s205 = sshll.u32 [#allocation8], 4
          %s206 = int_to_ptr.vmem [resolvable:$true] %s205
          %211 = dma.hbm_to_vmem [thread:$0]  %s4, 2048, %s206, [#allocation9], 128, 128, 8
        $region28: #{_seres_forward.1} parent=11 // pred_fallthru
          _
      $region12: #{_seres_forward.1} parent=5 // pred_fallthru
        _
      %p212 = scmp.lt.s32.totalorder %s19, 2
      // Predicated region
      $region29: #{_seres_forward.1} parent=5 // pred_check
        %p213 = pneg %p212
      $region30: #{_seres_forward.1} parent=5 // pred_check_branch
        %215 = sbr.rel (%p213) target = $region32
      $region31: #{_seres_forward.1} parent=5 // pred_region
        // Predicated region
        $region33: #{_seres_forward.1} parent=31 // pred_check
          %p216 = pneg %p39
        $region34: #{_seres_forward.1} parent=31 // pred_check_branch
          %218 = sbr.rel (%p216) target = $region36
        $region35: #{_seres_forward.1} parent=31 // pred_region
          %s219 = sand.u32 %s29, 1
          %s220 = scalar_lea.sflag [#allocation3], %s219
          %s221 = sand.u32 %s29, 1
          %s222 = smul.addr %s221, 128
          %s223 = scalar_lea.vmem [#allocation2], %s222
          %s224 = smul.u32 16, %s19
          %s226 = ssub.s32 2048, 2048
          %227 = vsyncadd %s220, %s226
          %s228 = smul.addr %s224, 128
          %s229 = scalar_lea.hbm %s0, %s228
          %s230 = sshll.u32 %s223, 4
          %s231 = int_to_ptr.vmem [resolvable:$true] %s230
          %236 = dma.hbm_to_vmem [thread:$0]  %s229, 2048, %s231, %s220, 128, 128, 8
        $region36: #{_seres_forward.1} parent=31 // pred_fallthru
          _
      $region32: #{_seres_forward.1} parent=5 // pred_fallthru
        _
      %p237 = scmp.le.s32.totalorder 1, %s19
      %p238 = scmp.lt.s32.totalorder %s19, 3
      %p239 = pnand %p237, %p238
      %p240 = pneg %p239
      // Predicated region
      $region37: #{_seres_forward.1} parent=5 // pred_check
        _
      $region38: #{_seres_forward.1} parent=5 // pred_check_branch
        %242 = sbr.rel (%p239) target = $region40
      $region39: #{_seres_forward.1} parent=5 // pred_region
        %s243 = ssub.s32 %s19, 1
        %s244 = sand.u32 %s32, 1
        %s245 = scalar_lea.sflag [#allocation3], %s244
        %s246 = sand.u32 %s32, 1
        %s247 = smul.addr %s246, 128
        %s248 = scalar_lea.vmem [#allocation2], %s247
        // Predicated region
        $region41: #{_seres_forward.1} parent=39 // pred_check
          %p249 = pneg %p45
        $region42: #{_seres_forward.1} parent=39 // pred_check_branch
          %251 = sbr.rel (%p249) target = $region44
        $region43: #{_seres_forward.1} parent=39 // pred_region
          %252 = dma.done %s245, 2048
        $region44: #{_seres_forward.1} parent=39 // pred_fallthru
          _
        // Predicated region
        $region45: #{_seres_forward.1} parent=39 // pred_check
          %p253 = pneg %p66
        $region46: #{_seres_forward.1} parent=39 // pred_check_branch
          %255 = sbr.rel (%p253) target = $region48
        $region47: #{_seres_forward.1} parent=39 // pred_region
          %256 = dma.done [#allocation6], 4096
        $region48: #{_seres_forward.1} parent=39 // pred_fallthru
          _
        // Predicated region
        $region49: #{_seres_forward.1} parent=39 // pred_check
          %p257 = pneg %p108
        $region50: #{_seres_forward.1} parent=39 // pred_check_branch
          %259 = sbr.rel (%p257) target = $region52
        $region51: #{_seres_forward.1} parent=39 // pred_region
          %260 = dma.done [#allocation6], 2048
        $region52: #{_seres_forward.1} parent=39 // pred_fallthru
          _
        // Predicated region
        $region53: #{_seres_forward.1} parent=39 // pred_check
          %p261 = pneg %p129
        $region54: #{_seres_forward.1} parent=39 // pred_check_branch
          %263 = sbr.rel (%p261) target = $region56
        $region55: #{_seres_forward.1} parent=39 // pred_region
          %264 = dma.done [#allocation9], 2048
        $region56: #{_seres_forward.1} parent=39 // pred_fallthru
          _
        %s265 = sand.u32 %s32, 1
        %s266 = scalar_lea.sflag [#allocation3], %s265
        %s267 = sand.u32 %s32, 1
        %s268 = smul.addr %s267, 128
        %s269 = scalar_lea.vmem [#allocation2], %s268
        %p270 = pneg %p45
        %p271 = pneg %p42
        %p272 = pneg %p66
        %p273 = pneg %p63
        %p274 = pneg %p87
        %p275 = pneg %p84
        %p276 = pneg %p108
        %p277 = pneg %p105
        %p278 = pneg %p129
        %p279 = pneg %p126
        %p280 = pneg %p155
        %p281 = pneg %p152
        %s282 = sand.u32 %s142, 1
        %s283 = scalar_lea.sflag [#allocation4], %s282
        %s284 = sand.u32 %s142, 1
        %s285 = smul.addr %s284, 128
        %s286 = scalar_lea.vmem [#allocation10], %s285
        %s287 = smul.u32 16, %s24
        %s288 = smul.u32 16, %s24
        %v289 = vld [vmem:[%s248] sm:$0xff]
        %v290 = vld [vmem:[%s248 + $0x8] sm:$0xff]
        %v291 = vld [vmem:[%s248 + $0x10] sm:$0xff]
        %v292 = vld [vmem:[%s248 + $0x18] sm:$0xff]
        %v293 = vld [vmem:[%s248 + $0x20] sm:$0xff]
        %v294 = vld [vmem:[%s248 + $0x28] sm:$0xff]
        %v295 = vld [vmem:[%s248 + $0x30] sm:$0xff]
        %v296 = vld [vmem:[%s248 + $0x38] sm:$0xff]
        %v297 = vld [vmem:[%s248 + $0x40] sm:$0xff]
        %v298 = vld [vmem:[%s248 + $0x48] sm:$0xff]
        %v299 = vld [vmem:[%s248 + $0x50] sm:$0xff]
        %v300 = vld [vmem:[%s248 + $0x58] sm:$0xff]
        %v301 = vld [vmem:[%s248 + $0x60] sm:$0xff]
        %v302 = vld [vmem:[%s248 + $0x68] sm:$0xff]
        %v303 = vld [vmem:[%s248 + $0x70] sm:$0xff]
        %v304 = vld [vmem:[%s248 + $0x78] sm:$0xff]
        %v305 = vld [vmem:[#allocation5] sm:$0xff]
        %v306 = vld [vmem:[#allocation5 + $0x8] sm:$0xff]
        %v307 = vld [vmem:[#allocation5 + $0x10] sm:$0xff]
        %v308 = vld [vmem:[#allocation5 + $0x18] sm:$0xff]
        %v309 = vld [vmem:[#allocation5 + $0x20] sm:$0xff]
        %v310 = vld [vmem:[#allocation5 + $0x28] sm:$0xff]
        %v311 = vld [vmem:[#allocation5 + $0x30] sm:$0xff]
        %v312 = vld [vmem:[#allocation5 + $0x38] sm:$0xff]
        %v313 = vld [vmem:[#allocation5 + $0x40] sm:$0xff]
        %v314 = vld [vmem:[#allocation5 + $0x48] sm:$0xff]
        %v315 = vld [vmem:[#allocation5 + $0x50] sm:$0xff]
        %v316 = vld [vmem:[#allocation5 + $0x58] sm:$0xff]
        %v317 = vld [vmem:[#allocation5 + $0x60] sm:$0xff]
        %v318 = vld [vmem:[#allocation5 + $0x68] sm:$0xff]
        %v319 = vld [vmem:[#allocation5 + $0x70] sm:$0xff]
        %v320 = vld [vmem:[#allocation5 + $0x78] sm:$0xff]
        %v321 = vld [vmem:[#allocation5 + $0x80] sm:$0xff]
        %v322 = vld [vmem:[#allocation5 + $0x88] sm:$0xff]
        %v323 = vld [vmem:[#allocation5 + $0x90] sm:$0xff]
        %v324 = vld [vmem:[#allocation5 + $0x98] sm:$0xff]
        %v325 = vld [vmem:[#allocation5 + $0xa0] sm:$0xff]
        %v326 = vld [vmem:[#allocation5 + $0xa8] sm:$0xff]
        %v327 = vld [vmem:[#allocation5 + $0xb0] sm:$0xff]
        %v328 = vld [vmem:[#allocation5 + $0xb8] sm:$0xff]
        %v329 = vld [vmem:[#allocation5 + $0xc0] sm:$0xff]
        %v330 = vld [vmem:[#allocation5 + $0xc8] sm:$0xff]
        %v331 = vld [vmem:[#allocation5 + $0xd0] sm:$0xff]
        %v332 = vld [vmem:[#allocation5 + $0xd8] sm:$0xff]
        %v333 = vld [vmem:[#allocation5 + $0xe0] sm:$0xff]
        %v334 = vld [vmem:[#allocation5 + $0xe8] sm:$0xff]
        %v335 = vld [vmem:[#allocation5 + $0xf0] sm:$0xff]
        %v336 = vld [vmem:[#allocation5 + $0xf8] sm:$0xff]
        %v337 = vld [vmem:[%s2] sm:$0x3]
        %v339 = vlaneseq
        %v340 = vshrl.u32 %v339, 7
        %v341 = vsub.s32 0, %v340
        %v342 = vrot.slane %v337, %v341
        %v343 = vlaneseq
        %v344 = vshrl.u32 %v343, 7
        %v345 = vsub.s32 1, %v344
        %v346 = vrot.slane %v337, %v345
        %349 = vmatprep.subr.mxu0 %v336
        %350 = vmatpush1.msra.mxu0 %v335
        %351 = vmatprep.subr.mxu0 %v334
        %352 = vmatpush1.msra.mxu0 %v333
        %353 = vmatprep.subr.mxu0 %v332
        %354 = vmatpush1.msra.mxu0 %v331
        %355 = vmatprep.subr.mxu0 %v330
        %356 = vmatpush1.msra.mxu0 %v329
        %357 = vmatprep.subr.mxu0 %v328
        %358 = vmatpush1.msra.mxu0 %v327
        %359 = vmatprep.subr.mxu0 %v326
        %360 = vmatpush1.msra.mxu0 %v325
        %361 = vmatprep.subr.mxu0 %v324
        %362 = vmatpush1.msra.mxu0 %v323
        %363 = vmatprep.subr.mxu0 %v322
        %364 = vmatpush1.msra.mxu0 %v321
        %365 = vmatprep.subr.mxu0 %v320
        %366 = vmatpush1.msra.mxu0 %v319
        %367 = vmatprep.subr.mxu0 %v318
        %368 = vmatpush1.msra.mxu0 %v317
        %369 = vmatprep.subr.mxu0 %v316
        %370 = vmatpush1.msra.mxu0 %v315
        %371 = vmatprep.subr.mxu0 %v314
        %372 = vmatpush1.msra.mxu0 %v313
        %373 = vmatprep.subr.mxu0 %v312
        %374 = vmatpush1.msra.mxu0 %v311
        %375 = vmatprep.subr.mxu0 %v310
        %376 = vmatpush1.msra.mxu0 %v309
        %377 = vmatprep.subr.mxu0 %v308
        %378 = vmatpush1.msra.mxu0 %v307
        %379 = vmatprep.subr.mxu0 %v306
        %380 = vmatpush1.msra.mxu0 %v305
        %381 = vmatprep.subr.mxu0 0.0
        %382 = vmatpush2.msra.mxu0 0.0
        %383 = vmatprep.subr.mxu0 0.0
        %384 = vmatpush2.msra.mxu0 0.0
        %385 = vmatprep.subr.mxu0 0.0
        %386 = vmatpush2.msra.mxu0 0.0
        %387 = vmatprep.subr.mxu0 0.0
        %388 = vmatpush2.msra.mxu0 0.0
        %389 = vmatprep.subr.mxu0 0.0
        %390 = vmatpush2.msra.mxu0 0.0
        %391 = vmatprep.subr.mxu0 0.0
        %392 = vmatpush2.msra.mxu0 0.0
        %393 = vmatprep.subr.mxu0 0.0
        %394 = vmatpush2.msra.mxu0 0.0
        %395 = vmatprep.subr.mxu0 0.0
        %396 = vmatpush2.msra.mxu0 0.0
        %397 = vmatprep.subr.mxu0 0.0
        %398 = vmatpush2.msra.mxu0 0.0
        %399 = vmatprep.subr.mxu0 0.0
        %400 = vmatpush2.msra.mxu0 0.0
        %401 = vmatprep.subr.mxu0 0.0
        %402 = vmatpush2.msra.mxu0 0.0
        %403 = vmatprep.subr.mxu0 0.0
        %404 = vmatpush2.msra.mxu0 0.0
        %405 = vmatprep.subr.mxu0 0.0
        %406 = vmatpush2.msra.mxu0 0.0
        %407 = vmatprep.subr.mxu0 0.0
        %408 = vmatpush2.msra.mxu0 0.0
        %409 = vmatprep.subr.mxu0 0.0
        %410 = vmatpush2.msra.mxu0 0.0
        %411 = vmatprep.subr.mxu0 0.0
        %412 = vmatpush2.msra.mxu0 0.0
        %413 = vmatprep.mubr.f32.mxu0 0.0
        %414 = vmatmul.mubr.f32.gmra.mxu0 %v289
        %v415 = vpop.f32.mrf.mxu0
        %v416 = vadd.f32 %v342, %v415
        %v417 = vpop.f32.mrf.mxu0
        %v418 = vadd.f32 %v346, %v417
        %419 = vmatprep.mubr.f32.mxu0 0.0
        %420 = vmatmul.mubr.f32.gmra.mxu0 %v290
        %v421 = vpop.f32.mrf.mxu0
        %v422 = vadd.f32 %v342, %v421
        %v423 = vpop.f32.mrf.mxu0
        %v424 = vadd.f32 %v346, %v423
        %425 = vmatprep.mubr.f32.mxu0 0.0
        %426 = vmatmul.mubr.f32.gmra.mxu0 %v291
        %v427 = vpop.f32.mrf.mxu0
        %v428 = vadd.f32 %v342, %v427
        %v429 = vpop.f32.mrf.mxu0
        %v430 = vadd.f32 %v346, %v429
        %431 = vmatprep.mubr.f32.mxu0 0.0
        %432 = vmatmul.mubr.f32.gmra.mxu0 %v292
        %v433 = vpop.f32.mrf.mxu0
        %v434 = vadd.f32 %v342, %v433
        %v435 = vpop.f32.mrf.mxu0
        %v436 = vadd.f32 %v346, %v435
        %437 = vmatprep.mubr.f32.mxu0 0.0
        %438 = vmatmul.mubr.f32.gmra.mxu0 %v293
        %v439 = vpop.f32.mrf.mxu0
        %v440 = vadd.f32 %v342, %v439
        %v441 = vpop.f32.mrf.mxu0
        %v442 = vadd.f32 %v346, %v441
        %443 = vmatprep.mubr.f32.mxu0 0.0
        %444 = vmatmul.mubr.f32.gmra.mxu0 %v294
        %v445 = vpop.f32.mrf.mxu0
        %v446 = vadd.f32 %v342, %v445
        %v447 = vpop.f32.mrf.mxu0
        %v448 = vadd.f32 %v346, %v447
        %449 = vmatprep.mubr.f32.mxu0 0.0
        %450 = vmatmul.mubr.f32.gmra.mxu0 %v295
        %v451 = vpop.f32.mrf.mxu0
        %v452 = vadd.f32 %v342, %v451
        %v453 = vpop.f32.mrf.mxu0
        %v454 = vadd.f32 %v346, %v453
        %455 = vmatprep.mubr.f32.mxu0 0.0
        %456 = vmatmul.mubr.f32.gmra.mxu0 %v296
        %v457 = vpop.f32.mrf.mxu0
        %v458 = vadd.f32 %v342, %v457
        %v459 = vpop.f32.mrf.mxu0
        %v460 = vadd.f32 %v346, %v459
        %461 = vmatprep.mubr.f32.mxu0 0.0
        %462 = vmatmul.mubr.f32.gmra.mxu0 %v297
        %v463 = vpop.f32.mrf.mxu0
        %v464 = vadd.f32 %v342, %v463
        %v465 = vpop.f32.mrf.mxu0
        %v466 = vadd.f32 %v346, %v465
        %467 = vmatprep.mubr.f32.mxu0 0.0
        %468 = vmatmul.mubr.f32.gmra.mxu0 %v298
        %v469 = vpop.f32.mrf.mxu0
        %v470 = vadd.f32 %v342, %v469
        %v471 = vpop.f32.mrf.mxu0
        %v472 = vadd.f32 %v346, %v471
        %473 = vmatprep.mubr.f32.mxu0 0.0
        %474 = vmatmul.mubr.f32.gmra.mxu0 %v299
        %v475 = vpop.f32.mrf.mxu0
        %v476 = vadd.f32 %v342, %v475
        %v477 = vpop.f32.mrf.mxu0
        %v478 = vadd.f32 %v346, %v477
        %479 = vmatprep.mubr.f32.mxu0 0.0
        %480 = vmatmul.mubr.f32.gmra.mxu0 %v300
        %v481 = vpop.f32.mrf.mxu0
        %v482 = vadd.f32 %v342, %v481
        %v483 = vpop.f32.mrf.mxu0
        %v484 = vadd.f32 %v346, %v483
        %485 = vmatprep.mubr.f32.mxu0 0.0
        %486 = vmatmul.mubr.f32.gmra.mxu0 %v301
        %v487 = vpop.f32.mrf.mxu0
        %v488 = vadd.f32 %v342, %v487
        %v489 = vpop.f32.mrf.mxu0
        %v490 = vadd.f32 %v346, %v489
        %491 = vmatprep.mubr.f32.mxu0 0.0
        %492 = vmatmul.mubr.f32.gmra.mxu0 %v302
        %v493 = vpop.f32.mrf.mxu0
        %v494 = vadd.f32 %v342, %v493
        %v495 = vpop.f32.mrf.mxu0
        %v496 = vadd.f32 %v346, %v495
        %497 = vmatprep.mubr.f32.mxu0 0.0
        %498 = vmatmul.mubr.f32.gmra.mxu0 %v303
        %v499 = vpop.f32.mrf.mxu0
        %v500 = vadd.f32 %v342, %v499
        %v501 = vpop.f32.mrf.mxu0
        %v502 = vadd.f32 %v346, %v501
        %503 = vmatprep.mubr.f32.mxu0 0.0
        %504 = vmatmul.mubr.f32.gmra.mxu0 %v304
        %v505 = vpop.f32.mrf.mxu0
        %v506 = vadd.f32 %v342, %v505
        %v507 = vpop.f32.mrf.mxu0
        %v508 = vadd.f32 %v346, %v507
        %509 = vdwg.mxu0
        %v510 = vmax.f32 %v416, 0.0
        %v511 = vmax.f32 %v418, 0.0
        %v512 = vmax.f32 %v422, 0.0
        %v513 = vmax.f32 %v424, 0.0
        %v514 = vmax.f32 %v428, 0.0
        %v515 = vmax.f32 %v430, 0.0
        %v516 = vmax.f32 %v434, 0.0
        %v517 = vmax.f32 %v436, 0.0
        %v518 = vmax.f32 %v440, 0.0
        %v519 = vmax.f32 %v442, 0.0
        %v520 = vmax.f32 %v446, 0.0
        %v521 = vmax.f32 %v448, 0.0
        %v522 = vmax.f32 %v452, 0.0
        %v523 = vmax.f32 %v454, 0.0
        %v524 = vmax.f32 %v458, 0.0
        %v525 = vmax.f32 %v460, 0.0
        %v526 = vmax.f32 %v464, 0.0
        %v527 = vmax.f32 %v466, 0.0
        %v528 = vmax.f32 %v470, 0.0
        %v529 = vmax.f32 %v472, 0.0
        %v530 = vmax.f32 %v476, 0.0
        %v531 = vmax.f32 %v478, 0.0
        %v532 = vmax.f32 %v482, 0.0
        %v533 = vmax.f32 %v484, 0.0
        %v534 = vmax.f32 %v488, 0.0
        %v535 = vmax.f32 %v490, 0.0
        %v536 = vmax.f32 %v494, 0.0
        %v537 = vmax.f32 %v496, 0.0
        %v538 = vmax.f32 %v500, 0.0
        %v539 = vmax.f32 %v502, 0.0
        %v540 = vmax.f32 %v506, 0.0
        %v541 = vmax.f32 %v508, 0.0
        %v542 = vld [vmem:[#allocation7] sm:$0xff]
        %v543 = vld [vmem:[#allocation7 + $0x8] sm:$0xff]
        %v544 = vld [vmem:[#allocation7 + $0x10] sm:$0xff]
        %v545 = vld [vmem:[#allocation7 + $0x18] sm:$0xff]
        %v546 = vld [vmem:[#allocation7 + $0x20] sm:$0xff]
        %v547 = vld [vmem:[#allocation7 + $0x28] sm:$0xff]
        %v548 = vld [vmem:[#allocation7 + $0x30] sm:$0xff]
        %v549 = vld [vmem:[#allocation7 + $0x38] sm:$0xff]
        %v550 = vld [vmem:[#allocation7 + $0x40] sm:$0xff]
        %v551 = vld [vmem:[#allocation7 + $0x48] sm:$0xff]
        %v552 = vld [vmem:[#allocation7 + $0x50] sm:$0xff]
        %v553 = vld [vmem:[#allocation7 + $0x58] sm:$0xff]
        %v554 = vld [vmem:[#allocation7 + $0x60] sm:$0xff]
        %v555 = vld [vmem:[#allocation7 + $0x68] sm:$0xff]
        %v556 = vld [vmem:[#allocation7 + $0x70] sm:$0xff]
        %v557 = vld [vmem:[#allocation7 + $0x78] sm:$0xff]
        %558 = vmatprep.subr.mxu0 0.0
        %559 = vmatpush1.msra.mxu0 %v557
        %560 = vmatprep.subr.mxu0 0.0
        %561 = vmatpush1.msra.mxu0 %v556
        %562 = vmatprep.subr.mxu0 0.0
        %563 = vmatpush1.msra.mxu0 %v555
        %564 = vmatprep.subr.mxu0 0.0
        %565 = vmatpush1.msra.mxu0 %v554
        %566 = vmatprep.subr.mxu0 0.0
        %567 = vmatpush1.msra.mxu0 %v553
        %568 = vmatprep.subr.mxu0 0.0
        %569 = vmatpush1.msra.mxu0 %v552
        %570 = vmatprep.subr.mxu0 0.0
        %571 = vmatpush1.msra.mxu0 %v551
        %572 = vmatprep.subr.mxu0 0.0
        %573 = vmatpush1.msra.mxu0 %v550
        %574 = vmatprep.subr.mxu0 0.0
        %575 = vmatpush1.msra.mxu0 %v549
        %576 = vmatprep.subr.mxu0 0.0
        %577 = vmatpush1.msra.mxu0 %v548
        %578 = vmatprep.subr.mxu0 0.0
        %579 = vmatpush1.msra.mxu0 %v547
        %580 = vmatprep.subr.mxu0 0.0
        %581 = vmatpush1.msra.mxu0 %v546
        %582 = vmatprep.subr.mxu0 0.0
        %583 = vmatpush1.msra.mxu0 %v545
        %584 = vmatprep.subr.mxu0 0.0
        %585 = vmatpush1.msra.mxu0 %v544
        %586 = vmatprep.subr.mxu0 0.0
        %587 = vmatpush1.msra.mxu0 %v543
        %588 = vmatprep.subr.mxu0 0.0
        %589 = vmatpush1.msra.mxu0 %v542
        %590 = vmatprep.subr.mxu0 0.0
        %591 = vmatpush2.msra.mxu0 0.0
        %592 = vmatprep.subr.mxu0 0.0
        %593 = vmatpush2.msra.mxu0 0.0
        %594 = vmatprep.subr.mxu0 0.0
        %595 = vmatpush2.msra.mxu0 0.0
        %596 = vmatprep.subr.mxu0 0.0
        %597 = vmatpush2.msra.mxu0 0.0
        %598 = vmatprep.subr.mxu0 0.0
        %599 = vmatpush2.msra.mxu0 0.0
        %600 = vmatprep.subr.mxu0 0.0
        %601 = vmatpush2.msra.mxu0 0.0
        %602 = vmatprep.subr.mxu0 0.0
        %603 = vmatpush2.msra.mxu0 0.0
        %604 = vmatprep.subr.mxu0 0.0
        %605 = vmatpush2.msra.mxu0 0.0
        %606 = vmatprep.subr.mxu0 0.0
        %607 = vmatpush2.msra.mxu0 0.0
        %608 = vmatprep.subr.mxu0 0.0
        %609 = vmatpush2.msra.mxu0 0.0
        %610 = vmatprep.subr.mxu0 0.0
        %611 = vmatpush2.msra.mxu0 0.0
        %612 = vmatprep.subr.mxu0 0.0
        %613 = vmatpush2.msra.mxu0 0.0
        %614 = vmatprep.subr.mxu0 0.0
        %615 = vmatpush2.msra.mxu0 0.0
        %616 = vmatprep.subr.mxu0 0.0
        %617 = vmatpush2.msra.mxu0 0.0
        %618 = vmatprep.subr.mxu0 0.0
        %619 = vmatpush2.msra.mxu0 0.0
        %620 = vmatprep.subr.mxu0 0.0
        %621 = vmatpush2.msra.mxu0 0.0
        %622 = vmatprep.mubr.f32.mxu0 0.0
        %623 = vmatmul.mubr.f32.gmra.mxu0 %v511
        %v624 = vpop.f32.mrf.mxu0
        %v625 = vadd.f32 0.0, %v624
        %v626 = vpop.f32.mrf.mxu0
        %627 = vmatprep.mubr.f32.mxu0 0.0
        %628 = vmatmul.mubr.f32.gmra.mxu0 %v513
        %v629 = vpop.f32.mrf.mxu0
        %v630 = vadd.f32 0.0, %v629
        %v631 = vpop.f32.mrf.mxu0
        %632 = vmatprep.mubr.f32.mxu0 0.0
        %633 = vmatmul.mubr.f32.gmra.mxu0 %v515
        %v634 = vpop.f32.mrf.mxu0
        %v635 = vadd.f32 0.0, %v634
        %v636 = vpop.f32.mrf.mxu0
        %637 = vmatprep.mubr.f32.mxu0 0.0
        %638 = vmatmul.mubr.f32.gmra.mxu0 %v517
        %v639 = vpop.f32.mrf.mxu0
        %v640 = vadd.f32 0.0, %v639
        %v641 = vpop.f32.mrf.mxu0
        %642 = vmatprep.mubr.f32.mxu0 0.0
        %643 = vmatmul.mubr.f32.gmra.mxu0 %v519
        %v644 = vpop.f32.mrf.mxu0
        %v645 = vadd.f32 0.0, %v644
        %v646 = vpop.f32.mrf.mxu0
        %647 = vmatprep.mubr.f32.mxu0 0.0
        %648 = vmatmul.mubr.f32.gmra.mxu0 %v521
        %v649 = vpop.f32.mrf.mxu0
        %v650 = vadd.f32 0.0, %v649
        %v651 = vpop.f32.mrf.mxu0
        %652 = vmatprep.mubr.f32.mxu0 0.0
        %653 = vmatmul.mubr.f32.gmra.mxu0 %v523
        %v654 = vpop.f32.mrf.mxu0
        %v655 = vadd.f32 0.0, %v654
        %v656 = vpop.f32.mrf.mxu0
        %657 = vmatprep.mubr.f32.mxu0 0.0
        %658 = vmatmul.mubr.f32.gmra.mxu0 %v525
        %v659 = vpop.f32.mrf.mxu0
        %v660 = vadd.f32 0.0, %v659
        %v661 = vpop.f32.mrf.mxu0
        %662 = vmatprep.mubr.f32.mxu0 0.0
        %663 = vmatmul.mubr.f32.gmra.mxu0 %v527
        %v664 = vpop.f32.mrf.mxu0
        %v665 = vadd.f32 0.0, %v664
        %v666 = vpop.f32.mrf.mxu0
        %667 = vmatprep.mubr.f32.mxu0 0.0
        %668 = vmatmul.mubr.f32.gmra.mxu0 %v529
        %v669 = vpop.f32.mrf.mxu0
        %v670 = vadd.f32 0.0, %v669
        %v671 = vpop.f32.mrf.mxu0
        %672 = vmatprep.mubr.f32.mxu0 0.0
        %673 = vmatmul.mubr.f32.gmra.mxu0 %v531
        %v674 = vpop.f32.mrf.mxu0
        %v675 = vadd.f32 0.0, %v674
        %v676 = vpop.f32.mrf.mxu0
        %677 = vmatprep.mubr.f32.mxu0 0.0
        %678 = vmatmul.mubr.f32.gmra.mxu0 %v533
        %v679 = vpop.f32.mrf.mxu0
        %v680 = vadd.f32 0.0, %v679
        %v681 = vpop.f32.mrf.mxu0
        %682 = vmatprep.mubr.f32.mxu0 0.0
        %683 = vmatmul.mubr.f32.gmra.mxu0 %v535
        %v684 = vpop.f32.mrf.mxu0
        %v685 = vadd.f32 0.0, %v684
        %v686 = vpop.f32.mrf.mxu0
        %687 = vmatprep.mubr.f32.mxu0 0.0
        %688 = vmatmul.mubr.f32.gmra.mxu0 %v537
        %v689 = vpop.f32.mrf.mxu0
        %v690 = vadd.f32 0.0, %v689
        %v691 = vpop.f32.mrf.mxu0
        %692 = vmatprep.mubr.f32.mxu0 0.0
        %693 = vmatmul.mubr.f32.gmra.mxu0 %v539
        %v694 = vpop.f32.mrf.mxu0
        %v695 = vadd.f32 0.0, %v694
        %v696 = vpop.f32.mrf.mxu0
        %697 = vmatprep.mubr.f32.mxu0 0.0
        %698 = vmatmul.mubr.f32.gmra.mxu0 %v541
        %v699 = vpop.f32.mrf.mxu0
        %v700 = vadd.f32 0.0, %v699
        %v701 = vpop.f32.mrf.mxu0
        %702 = vdwg.mxu0
        %v703 = vmax.f32 %v625, 0.0
        %v704 = vmax.f32 %v630, 0.0
        %v705 = vmax.f32 %v635, 0.0
        %v706 = vmax.f32 %v640, 0.0
        %v707 = vmax.f32 %v645, 0.0
        %v708 = vmax.f32 %v650, 0.0
        %v709 = vmax.f32 %v655, 0.0
        %v710 = vmax.f32 %v660, 0.0
        %v711 = vmax.f32 %v665, 0.0
        %v712 = vmax.f32 %v670, 0.0
        %v713 = vmax.f32 %v675, 0.0
        %v714 = vmax.f32 %v680, 0.0
        %v715 = vmax.f32 %v685, 0.0
        %v716 = vmax.f32 %v690, 0.0
        %v717 = vmax.f32 %v695, 0.0
        %v718 = vmax.f32 %v700, 0.0
        %v719 = vld [vmem:[#allocation8] sm:$0xff]
        %v720 = vld [vmem:[#allocation8 + $0x8] sm:$0xff]
        %v721 = vld [vmem:[#allocation8 + $0x10] sm:$0xff]
        %v722 = vld [vmem:[#allocation8 + $0x18] sm:$0xff]
        %v723 = vld [vmem:[#allocation8 + $0x20] sm:$0xff]
        %v724 = vld [vmem:[#allocation8 + $0x28] sm:$0xff]
        %v725 = vld [vmem:[#allocation8 + $0x30] sm:$0xff]
        %v726 = vld [vmem:[#allocation8 + $0x38] sm:$0xff]
        %v727 = vld [vmem:[#allocation8 + $0x40] sm:$0xff]
        %v728 = vld [vmem:[#allocation8 + $0x48] sm:$0xff]
        %v729 = vld [vmem:[#allocation8 + $0x50] sm:$0xff]
        %v730 = vld [vmem:[#allocation8 + $0x58] sm:$0xff]
        %v731 = vld [vmem:[#allocation8 + $0x60] sm:$0xff]
        %v732 = vld [vmem:[#allocation8 + $0x68] sm:$0xff]
        %v733 = vld [vmem:[#allocation8 + $0x70] sm:$0xff]
        %v734 = vld [vmem:[#allocation8 + $0x78] sm:$0xff]
        %735 = vmatprep.subr.mxu0 0.0
        %736 = vmatpush1.msra.mxu0 %v734
        %737 = vmatprep.subr.mxu0 0.0
        %738 = vmatpush1.msra.mxu0 %v733
        %739 = vmatprep.subr.mxu0 0.0
        %740 = vmatpush1.msra.mxu0 %v732
        %741 = vmatprep.subr.mxu0 0.0
        %742 = vmatpush1.msra.mxu0 %v731
        %743 = vmatprep.subr.mxu0 0.0
        %744 = vmatpush1.msra.mxu0 %v730
        %745 = vmatprep.subr.mxu0 0.0
        %746 = vmatpush1.msra.mxu0 %v729
        %747 = vmatprep.subr.mxu0 0.0
        %748 = vmatpush1.msra.mxu0 %v728
        %749 = vmatprep.subr.mxu0 0.0
        %750 = vmatpush1.msra.mxu0 %v727
        %751 = vmatprep.subr.mxu0 0.0
        %752 = vmatpush1.msra.mxu0 %v726
        %753 = vmatprep.subr.mxu0 0.0
        %754 = vmatpush1.msra.mxu0 %v725
        %755 = vmatprep.subr.mxu0 0.0
        %756 = vmatpush1.msra.mxu0 %v724
        %757 = vmatprep.subr.mxu0 0.0
        %758 = vmatpush1.msra.mxu0 %v723
        %759 = vmatprep.subr.mxu0 0.0
        %760 = vmatpush1.msra.mxu0 %v722
        %761 = vmatprep.subr.mxu0 0.0
        %762 = vmatpush1.msra.mxu0 %v721
        %763 = vmatprep.subr.mxu0 0.0
        %764 = vmatpush1.msra.mxu0 %v720
        %765 = vmatprep.subr.mxu0 0.0
        %766 = vmatpush1.msra.mxu0 %v719
        %767 = vmatprep.subr.mxu0 0.0
        %768 = vmatpush2.msra.mxu0 0.0
        %769 = vmatprep.subr.mxu0 0.0
        %770 = vmatpush2.msra.mxu0 0.0
        %771 = vmatprep.subr.mxu0 0.0
        %772 = vmatpush2.msra.mxu0 0.0
        %773 = vmatprep.subr.mxu0 0.0
        %774 = vmatpush2.msra.mxu0 0.0
        %775 = vmatprep.subr.mxu0 0.0
        %776 = vmatpush2.msra.mxu0 0.0
        %777 = vmatprep.subr.mxu0 0.0
        %778 = vmatpush2.msra.mxu0 0.0
        %779 = vmatprep.subr.mxu0 0.0
        %780 = vmatpush2.msra.mxu0 0.0
        %781 = vmatprep.subr.mxu0 0.0
        %782 = vmatpush2.msra.mxu0 0.0
        %783 = vmatprep.subr.mxu0 0.0
        %784 = vmatpush2.msra.mxu0 0.0
        %785 = vmatprep.subr.mxu0 0.0
        %786 = vmatpush2.msra.mxu0 0.0
        %787 = vmatprep.subr.mxu0 0.0
        %788 = vmatpush2.msra.mxu0 0.0
        %789 = vmatprep.subr.mxu0 0.0
        %790 = vmatpush2.msra.mxu0 0.0
        %791 = vmatprep.subr.mxu0 0.0
        %792 = vmatpush2.msra.mxu0 0.0
        %793 = vmatprep.subr.mxu0 0.0
        %794 = vmatpush2.msra.mxu0 0.0
        %795 = vmatprep.subr.mxu0 0.0
        %796 = vmatpush2.msra.mxu0 0.0
        %797 = vmatprep.subr.mxu0 0.0
        %798 = vmatpush2.msra.mxu0 0.0
        %799 = vmatprep.mubr.f32.mxu0 0.0
        %800 = vmatmul.mubr.f32.gmra.mxu0 %v703
        %v801 = vpop.f32.mrf.mxu0
        %v802 = vadd.f32 0.0, %v801
        %v803 = vpop.f32.mrf.mxu0
        %804 = vmatprep.mubr.f32.mxu0 0.0
        %805 = vmatmul.mubr.f32.gmra.mxu0 %v704
        %v806 = vpop.f32.mrf.mxu0
        %v807 = vadd.f32 0.0, %v806
        %v808 = vpop.f32.mrf.mxu0
        %809 = vmatprep.mubr.f32.mxu0 0.0
        %810 = vmatmul.mubr.f32.gmra.mxu0 %v705
        %v811 = vpop.f32.mrf.mxu0
        %v812 = vadd.f32 0.0, %v811
        %v813 = vpop.f32.mrf.mxu0
        %814 = vmatprep.mubr.f32.mxu0 0.0
        %815 = vmatmul.mubr.f32.gmra.mxu0 %v706
        %v816 = vpop.f32.mrf.mxu0
        %v817 = vadd.f32 0.0, %v816
        %v818 = vpop.f32.mrf.mxu0
        %819 = vmatprep.mubr.f32.mxu0 0.0
        %820 = vmatmul.mubr.f32.gmra.mxu0 %v707
        %v821 = vpop.f32.mrf.mxu0
        %v822 = vadd.f32 0.0, %v821
        %v823 = vpop.f32.mrf.mxu0
        %824 = vmatprep.mubr.f32.mxu0 0.0
        %825 = vmatmul.mubr.f32.gmra.mxu0 %v708
        %v826 = vpop.f32.mrf.mxu0
        %v827 = vadd.f32 0.0, %v826
        %v828 = vpop.f32.mrf.mxu0
        %829 = vmatprep.mubr.f32.mxu0 0.0
        %830 = vmatmul.mubr.f32.gmra.mxu0 %v709
        %v831 = vpop.f32.mrf.mxu0
        %v832 = vadd.f32 0.0, %v831
        %v833 = vpop.f32.mrf.mxu0
        %834 = vmatprep.mubr.f32.mxu0 0.0
        %835 = vmatmul.mubr.f32.gmra.mxu0 %v710
        %v836 = vpop.f32.mrf.mxu0
        %v837 = vadd.f32 0.0, %v836
        %v838 = vpop.f32.mrf.mxu0
        %839 = vmatprep.mubr.f32.mxu0 0.0
        %840 = vmatmul.mubr.f32.gmra.mxu0 %v711
        %v841 = vpop.f32.mrf.mxu0
        %v842 = vadd.f32 0.0, %v841
        %v843 = vpop.f32.mrf.mxu0
        %844 = vmatprep.mubr.f32.mxu0 0.0
        %845 = vmatmul.mubr.f32.gmra.mxu0 %v712
        %v846 = vpop.f32.mrf.mxu0
        %v847 = vadd.f32 0.0, %v846
        %v848 = vpop.f32.mrf.mxu0
        %849 = vmatprep.mubr.f32.mxu0 0.0
        %850 = vmatmul.mubr.f32.gmra.mxu0 %v713
        %v851 = vpop.f32.mrf.mxu0
        %v852 = vadd.f32 0.0, %v851
        %v853 = vpop.f32.mrf.mxu0
        %854 = vmatprep.mubr.f32.mxu0 0.0
        %855 = vmatmul.mubr.f32.gmra.mxu0 %v714
        %v856 = vpop.f32.mrf.mxu0
        %v857 = vadd.f32 0.0, %v856
        %v858 = vpop.f32.mrf.mxu0
        %859 = vmatprep.mubr.f32.mxu0 0.0
        %860 = vmatmul.mubr.f32.gmra.mxu0 %v715
        %v861 = vpop.f32.mrf.mxu0
        %v862 = vadd.f32 0.0, %v861
        %v863 = vpop.f32.mrf.mxu0
        %864 = vmatprep.mubr.f32.mxu0 0.0
        %865 = vmatmul.mubr.f32.gmra.mxu0 %v716
        %v866 = vpop.f32.mrf.mxu0
        %v867 = vadd.f32 0.0, %v866
        %v868 = vpop.f32.mrf.mxu0
        %869 = vmatprep.mubr.f32.mxu0 0.0
        %870 = vmatmul.mubr.f32.gmra.mxu0 %v717
        %v871 = vpop.f32.mrf.mxu0
        %v872 = vadd.f32 0.0, %v871
        %v873 = vpop.f32.mrf.mxu0
        %874 = vmatprep.mubr.f32.mxu0 0.0
        %875 = vmatmul.mubr.f32.gmra.mxu0 %v718
        %v876 = vpop.f32.mrf.mxu0
        %v877 = vadd.f32 0.0, %v876
        %v878 = vpop.f32.mrf.mxu0
        %879 = vdwg.mxu0
        %v880 = vxor.u32 %v802, 2147483648
        %v881 = vxor.u32 %v807, 2147483648
        %v882 = vxor.u32 %v812, 2147483648
        %v883 = vxor.u32 %v817, 2147483648
        %v884 = vxor.u32 %v822, 2147483648
        %v885 = vxor.u32 %v827, 2147483648
        %v886 = vxor.u32 %v832, 2147483648
        %v887 = vxor.u32 %v837, 2147483648
        %v888 = vxor.u32 %v842, 2147483648
        %v889 = vxor.u32 %v847, 2147483648
        %v890 = vxor.u32 %v852, 2147483648
        %v891 = vxor.u32 %v857, 2147483648
        %v892 = vxor.u32 %v862, 2147483648
        %v893 = vxor.u32 %v867, 2147483648
        %v894 = vxor.u32 %v872, 2147483648
        %v895 = vxor.u32 %v877, 2147483648
        %v896 = vmul.f32 %v880, 1.442695
        %v897 = vpow.pop %v896
        %v898 = vmul.f32 %v881, 1.442695
        %v899 = vpow.pop %v898
        %v900 = vmul.f32 %v882, 1.442695
        %v901 = vpow.pop %v900
        %v902 = vmul.f32 %v883, 1.442695
        %v903 = vpow.pop %v902
        %v904 = vmul.f32 %v884, 1.442695
        %v905 = vpow.pop %v904
        %v906 = vmul.f32 %v885, 1.442695
        %v907 = vpow.pop %v906
        %v908 = vmul.f32 %v886, 1.442695
        %v909 = vpow.pop %v908
        %v910 = vmul.f32 %v887, 1.442695
        %v911 = vpow.pop %v910
        %v912 = vmul.f32 %v888, 1.442695
        %v913 = vpow.pop %v912
        %v914 = vmul.f32 %v889, 1.442695
        %v915 = vpow.pop %v914
        %v916 = vmul.f32 %v890, 1.442695
        %v917 = vpow.pop %v916
        %v918 = vmul.f32 %v891, 1.442695
        %v919 = vpow.pop %v918
        %v920 = vmul.f32 %v892, 1.442695
        %v921 = vpow.pop %v920
        %v922 = vmul.f32 %v893, 1.442695
        %v923 = vpow.pop %v922
        %v924 = vmul.f32 %v894, 1.442695
        %v925 = vpow.pop %v924
        %v926 = vmul.f32 %v895, 1.442695
        %v927 = vpow.pop %v926
        %v928 = vadd.f32 %v897, 1.0
        %v929 = vadd.f32 %v899, 1.0
        %v930 = vadd.f32 %v901, 1.0
        %v931 = vadd.f32 %v903, 1.0
        %v932 = vadd.f32 %v905, 1.0
        %v933 = vadd.f32 %v907, 1.0
        %v934 = vadd.f32 %v909, 1.0
        %v935 = vadd.f32 %v911, 1.0
        %v936 = vadd.f32 %v913, 1.0
        %v937 = vadd.f32 %v915, 1.0
        %v938 = vadd.f32 %v917, 1.0
        %v939 = vadd.f32 %v919, 1.0
        %v940 = vadd.f32 %v921, 1.0
        %v941 = vadd.f32 %v923, 1.0
        %v942 = vadd.f32 %v925, 1.0
        %v943 = vadd.f32 %v927, 1.0
        %v944 = vrcp.pop %v928
        %v945 = vmul.f32 1.0, %v944
        %v946 = vrcp.pop %v929
        %v947 = vmul.f32 1.0, %v946
        %v948 = vrcp.pop %v930
        %v949 = vmul.f32 1.0, %v948
        %v950 = vrcp.pop %v931
        %v951 = vmul.f32 1.0, %v950
        %v952 = vrcp.pop %v932
        %v953 = vmul.f32 1.0, %v952
        %v954 = vrcp.pop %v933
        %v955 = vmul.f32 1.0, %v954
        %v956 = vrcp.pop %v934
        %v957 = vmul.f32 1.0, %v956
        %v958 = vrcp.pop %v935
        %v959 = vmul.f32 1.0, %v958
        %v960 = vrcp.pop %v936
        %v961 = vmul.f32 1.0, %v960
        %v962 = vrcp.pop %v937
        %v963 = vmul.f32 1.0, %v962
        %v964 = vrcp.pop %v938
        %v965 = vmul.f32 1.0, %v964
        %v966 = vrcp.pop %v939
        %v967 = vmul.f32 1.0, %v966
        %v968 = vrcp.pop %v940
        %v969 = vmul.f32 1.0, %v968
        %v970 = vrcp.pop %v941
        %v971 = vmul.f32 1.0, %v970
        %v972 = vrcp.pop %v942
        %v973 = vmul.f32 1.0, %v972
        %v974 = vrcp.pop %v943
        %v975 = vmul.f32 1.0, %v974
        %v976 = vmul.f32 %v945, %v511
        %v977 = vmul.f32 %v947, %v513
        %v978 = vmul.f32 %v949, %v515
        %v979 = vmul.f32 %v951, %v517
        %v980 = vmul.f32 %v953, %v519
        %v981 = vmul.f32 %v955, %v521
        %v982 = vmul.f32 %v957, %v523
        %v983 = vmul.f32 %v959, %v525
        %v984 = vmul.f32 %v961, %v527
        %v985 = vmul.f32 %v963, %v529
        %v986 = vmul.f32 %v965, %v531
        %v987 = vmul.f32 %v967, %v533
        %v988 = vmul.f32 %v969, %v535
        %v989 = vmul.f32 %v971, %v537
        %v990 = vmul.f32 %v973, %v539
        %v991 = vmul.f32 %v975, %v541
        %v992 = vadd.f32 %v510, %v976
        %v993 = vadd.f32 %v512, %v977
        %v994 = vadd.f32 %v514, %v978
        %v995 = vadd.f32 %v516, %v979
        %v996 = vadd.f32 %v518, %v980
        %v997 = vadd.f32 %v520, %v981
        %v998 = vadd.f32 %v522, %v982
        %v999 = vadd.f32 %v524, %v983
        %v1000 = vadd.f32 %v526, %v984
        %v1001 = vadd.f32 %v528, %v985
        %v1002 = vadd.f32 %v530, %v986
        %v1003 = vadd.f32 %v532, %v987
        %v1004 = vadd.f32 %v534, %v988
        %v1005 = vadd.f32 %v536, %v989
        %v1006 = vadd.f32 %v538, %v990
        %v1007 = vadd.f32 %v540, %v991
        %1008 = vst [vmem:[%s286] sm:$0xff] %v992
        %1009 = vst [vmem:[%s286 + $0x8] sm:$0xff] %v993
        %1010 = vst [vmem:[%s286 + $0x10] sm:$0xff] %v994
        %1011 = vst [vmem:[%s286 + $0x18] sm:$0xff] %v995
        %1012 = vst [vmem:[%s286 + $0x20] sm:$0xff] %v996
        %1013 = vst [vmem:[%s286 + $0x28] sm:$0xff] %v997
        %1014 = vst [vmem:[%s286 + $0x30] sm:$0xff] %v998
        %1015 = vst [vmem:[%s286 + $0x38] sm:$0xff] %v999
        %1016 = vst [vmem:[%s286 + $0x40] sm:$0xff] %v1000
        %1017 = vst [vmem:[%s286 + $0x48] sm:$0xff] %v1001
        %1018 = vst [vmem:[%s286 + $0x50] sm:$0xff] %v1002
        %1019 = vst [vmem:[%s286 + $0x58] sm:$0xff] %v1003
        %1020 = vst [vmem:[%s286 + $0x60] sm:$0xff] %v1004
        %1021 = vst [vmem:[%s286 + $0x68] sm:$0xff] %v1005
        %1022 = vst [vmem:[%s286 + $0x70] sm:$0xff] %v1006
        %1023 = vst [vmem:[%s286 + $0x78] sm:$0xff] %v1007
        %s1024 = sand.u32 %s142, 1
        %s1025 = scalar_lea.sflag [#allocation4], %s1024
        %s1026 = sand.u32 %s142, 1
        %s1027 = smul.addr %s1026, 128
        %s1028 = scalar_lea.vmem [#allocation10], %s1027
        // Predicated region
        $region57: #{_seres_forward.1} parent=39 // pred_check
          %p1029 = pneg %p152
        $region58: #{_seres_forward.1} parent=39 // pred_check_branch
          %1031 = sbr.rel (%p1029) target = $region60
        $region59: #{_seres_forward.1} parent=39 // pred_region
          %s1032 = smul.u32 16, %s24
          %s1034 = ssub.s32 2048, 2048
          %1035 = vsyncadd %s1025, %s1034
          %s1036 = smul.addr %s1032, 128
          %s1037 = scalar_lea.hbm %s5, %s1036
          %s1038 = sshll.u32 %s1028, 4
          %s1039 = int_to_ptr.vmem [resolvable:$true] %s1038
          %1044 = dma.vmem_to_hbm [thread:$0]  %s1039, 2048, %s1037, %s1025, 128, 128, 8
        $region60: #{_seres_forward.1} parent=39 // pred_fallthru
          _
      $region40: #{_seres_forward.1} parent=5 // pred_fallthru
        _
      %p1045 = scmp.le.s32.totalorder 2, %s19
      // Predicated region
      $region61: #{_seres_forward.1} parent=5 // pred_check
        %p1046 = pneg %p1045
      $region62: #{_seres_forward.1} parent=5 // pred_check_branch
        %1048 = sbr.rel (%p1046) target = $region64
      $region63: #{_seres_forward.1} parent=5 // pred_region
        %s1049 = ssub.s32 %s19, 2
        // Predicated region
        $region65: #{_seres_forward.1} parent=63 // pred_check
          %p1050 = pneg %p158
        $region66: #{_seres_forward.1} parent=63 // pred_check_branch
          %1052 = sbr.rel (%p1050) target = $region68
        $region67: #{_seres_forward.1} parent=63 // pred_region
          %s1053 = sand.u32 %s143, 1
          %s1054 = scalar_lea.sflag [#allocation4], %s1053
          %s1055 = sand.u32 %s143, 1
          %s1056 = smul.addr %s1055, 128
          %s1057 = scalar_lea.vmem [#allocation10], %s1056
          %1058 = dma.done %s1054, 2048
        $region68: #{_seres_forward.1} parent=63 // pred_fallthru
          _
      $region64: #{_seres_forward.1} parent=5 // pred_fallthru
        _
    $region6: #{_seres_forward.1} parent=1 // loop_footer
      %s23 = sadd.s32 1, %s19
    $region7: #{_seres_forward.1} parent=1 // loop_footer_branch
      %18 = sbr.rel target = $region3
    $region8: #{_seres_forward.1} parent=1 // loop_exit
      _
    %1059 = vsyncpa [#allocation3], 1
    %s1060 = scalar_lea.sflag [#allocation3], 1
    %1061 = vsyncpa %s1060, 1
    %1062 = vsyncpa [#allocation6], 1
    %1063 = vsyncpa [#allocation9], 1
    %1064 = vsyncpa [#allocation4], 1
    %s1065 = scalar_lea.sflag [#allocation4], 1
    %1066 = vsyncpa %s1065, 1

</llo_original>
